<compile_context>
chip_gen: v7x
topology: tpu7x:2x2x1
jax: 0.10.0
libtpu: 0.0.40
codegen_flags: <defaults>
</compile_context>

<pallas_src>
import math
import jax
import jax.numpy as jnp
from jax.experimental import pallas as pl
from jax.experimental.pallas import tpu as pltpu


# ----------------------------- Pallas kernels ------------------------------

def _encoder_kernel(x_ref, w_ref, b_ref, o_ref):
    # x_ref: (1, Tl, Din), w_ref: (Din, H), b_ref: (1, H), o_ref: (1, Tl, H)
    x = x_ref[0]
    o_ref[0] = jnp.dot(x, w_ref[...], preferred_element_type=jnp.float32) + b_ref[...]


def _s4_block_kernel(x_ref, conv_ref, d_ref, w_ref, b_ref, gamma_ref, beta_ref,
                     o_ref, pool_ref):
    # x_ref / conv_ref : (1, Tl, H)        d_ref / gamma_ref / beta_ref : (1, H)
    # w_ref            : (H, 2H) bf16      b_ref : (1, 2H) f32
    # o_ref            : (1, Tl, H)        pool_ref : (1, 1, H)  running sum over L tiles
    H = x_ref.shape[-1]
    x = x_ref[0]                                        # residual input (Tl, H)

    # SSM output: causal conv (precomputed via FFT outside) + D skip term
    y = conv_ref[0] + x * d_ref[...]

    # TODO(synk): PyTorch nn.GELU uses exact erf; tanh approximation used here.
    y = jax.nn.gelu(y, approximate=True)

    # Output projection Conv1d(H, 2H, 1) as ONE MXU matmul (bf16 operands, f32 accum),
    # then GLU over channels: first half = value, second half = gate (matches nn.GLU).
    og = jnp.dot(y.astype(jnp.bfloat16), w_ref[...],
                 preferred_element_type=jnp.float32) + b_ref[...]
    z = og[:, :H] * jax.nn.sigmoid(og[:, H:])

    # residual + post-LayerNorm over channel dim (prenorm=False), stats kept in f32
    r = z + x
    mu = jnp.mean(r, axis=-1, keepdims=True)
    var = jnp.mean((r - mu) ** 2, axis=-1, keepdims=True)
    out = (r - mu) * jax.lax.rsqrt(var + 1e-5) * gamma_ref[...] + beta_ref[...]
    o_ref[0] = out

    # fused mean-pool: accumulate the per-tile row sum across the L-tile grid axis
    rs = jnp.sum(out, axis=0, keepdims=True)[None]      # (1, 1, H)
    lt = pl.program_id(1)

    @pl.when(lt == 0)
    def _():
        pool_ref[...] = rs

    @pl.when(lt != 0)
    def _():
        pool_ref[...] = pool_ref[...] + rs


def _decoder_kernel(p_ref, w_ref, b_ref, o_ref):
    # p_ref: (B, H), w_ref: (H, Dout), b_ref: (1, Dout), o_ref: (B, Dout)
    o_ref[...] = (jnp.dot(p_ref[...], w_ref[...],
                          preferred_element_type=jnp.float32) + b_ref[...])


# ------------------------------ Pallas wrappers -----------------------------

def _choose_l_tile(L, max_tile=512):
    """Largest L tile that divides L, is a multiple of 8, and <= max_tile.
    Falls back to the full length (a block equal to the full dim is always legal)."""
    if L <= max_tile:
        return L
    for t in range(max_tile, 7, -1):
        if L % t == 0 and t % 8 == 0:
            return t
    return L


def encoder_forward(x, w, b, l_tile):
    B, L, Din = x.shape
    H = w.shape[1]
    n_lt = L // l_tile
    return pl.pallas_call(
        _encoder_kernel,
        out_shape=jax.ShapeDtypeStruct((B, L, H), jnp.float32),
        grid=(B, n_lt),
        in_specs=[
            pl.BlockSpec((1, l_tile, Din), lambda b_, lt: (b_, lt, 0)),
            pl.BlockSpec((Din, H), lambda b_, lt: (0, 0)),
            pl.BlockSpec((1, H), lambda b_, lt: (0, 0)),
        ],
        out_specs=pl.BlockSpec((1, l_tile, H), lambda b_, lt: (b_, lt, 0)),
        compiler_params=pltpu.CompilerParams(
            dimension_semantics=("parallel", "parallel")),
    )(x, w, b.reshape(1, H))


def s4_block_forward(x, conv, D, W_glu, b_glu, gamma, beta, l_tile):
    B, L, H = x.shape
    n_lt = L // l_tile
    bcast = lambda b_, lt: (0, 0)
    out, pooled_sum = pl.pallas_call(
        _s4_block_kernel,
        out_shape=(jax.ShapeDtypeStruct((B, L, H), jnp.float32),
                   jax.ShapeDtypeStruct((B, 1, H), jnp.float32)),
        grid=(B, n_lt),
        in_specs=[
            pl.BlockSpec((1, l_tile, H), lambda b_, lt: (b_, lt, 0)),   # x (residual)
            pl.BlockSpec((1, l_tile, H), lambda b_, lt: (b_, lt, 0)),   # FFT conv result
            pl.BlockSpec((1, H), bcast),                                # D
            pl.BlockSpec((H, 2 * H), bcast),                            # fused GLU weight (bf16)
            pl.BlockSpec((1, 2 * H), bcast),                            # fused GLU bias
            pl.BlockSpec((1, H), bcast),                                # LN gamma
            pl.BlockSpec((1, H), bcast),                                # LN beta
        ],
        out_specs=(pl.BlockSpec((1, l_tile, H), lambda b_, lt: (b_, lt, 0)),
                   pl.BlockSpec((1, 1, H), lambda b_, lt: (b_, 0, 0))),
        compiler_params=pltpu.CompilerParams(
            dimension_semantics=("parallel", "arbitrary")),
    )(x, conv, D.reshape(1, H), W_glu, b_glu.reshape(1, 2 * H),
      gamma.reshape(1, H), beta.reshape(1, H))
    return out, pooled_sum


def decoder_forward(pooled, w, b):
    B, H = pooled.shape
    Dout = w.shape[1]
    return pl.pallas_call(
        _decoder_kernel,
        out_shape=jax.ShapeDtypeStruct((B, Dout), jnp.float32),
        grid=(1,),
        in_specs=[
            pl.BlockSpec((B, H), lambda i: (0, 0)),
            pl.BlockSpec((H, Dout), lambda i: (0, 0)),
            pl.BlockSpec((1, Dout), lambda i: (0, 0)),
        ],
        out_specs=pl.BlockSpec((B, Dout), lambda i: (0, 0)),
    )(pooled, w, b.reshape(1, Dout))


# -------------------------- S4D kernel / FFT conv (JAX glue) -----------------

def s4d_ssm_kernel(log_dt, log_A_real, A_imag, C_re, C_im, L):
    """Vandermonde S4D convolution kernel: returns k of shape (H, L)."""
    dt = jnp.exp(log_dt)                               # (H,)
    A_re = -jnp.exp(log_A_real)                        # (H, N)
    dtA_re = A_re * dt[:, None]                        # (H, N)
    dtA_im = A_imag * dt[:, None]                      # (H, N)

    # C_tilde = C * (exp(dtA) - 1) / A   (complex, expanded to real arithmetic)
    e_re = jnp.exp(dtA_re) * jnp.cos(dtA_im) - 1.0
    e_im = jnp.exp(dtA_re) * jnp.sin(dtA_im)
    denom = A_re ** 2 + A_imag ** 2
    q_re = (e_re * A_re + e_im * A_imag) / denom
    q_im = (e_im * A_re - e_re * A_imag) / denom
    Ct_re = C_re * q_re - C_im * q_im
    Ct_im = C_re * q_im + C_im * q_re

    # K[h,n,l] = exp(dtA * l)
    l_range = jnp.arange(L, dtype=jnp.float32)
    K_mag = jnp.exp(dtA_re[:, :, None] * l_range)      # (H, N, L)
    K_re = K_mag * jnp.cos(dtA_im[:, :, None] * l_range)
    K_im = K_mag * jnp.sin(dtA_im[:, :, None] * l_range)

    # k = 2 * Re( sum_n Ct[h,n] * K[h,n,l] )
    k = 2.0 * (jnp.einsum('hn,hnl->hl', Ct_re, K_re)
               - jnp.einsum('hn,hnl->hl', Ct_im, K_im))
    return k.astype(jnp.float32)                       # (H, L)


def causal_fft_conv(u, k):
    """Causal length-L convolution of u (B, L, H) with per-channel kernel k (H, L),
    via zero-padded FFT of size 2L (the standard S4 fftconv).  Plain JAX: there is no
    Pallas TPU FFT primitive."""
    L = u.shape[1]
    n = 2 * L
    u_f = jnp.fft.rfft(u, n=n, axis=1)                         # (B, n//2+1, H)
    k_f = jnp.fft.rfft(k, n=n, axis=-1)                        # (H, n//2+1)
    y = jnp.fft.irfft(u_f * jnp.transpose(k_f)[None], n=n, axis=1)[:, :L, :]
    return y.astype(jnp.float32)


# ------------------------------ model forward -------------------------------

def s4_model_forward(x, prep):
    B, L, _ = x.shape
    l_tile = _choose_l_tile(L)

    h = encoder_forward(x, prep['enc_w'], prep['enc_b'], l_tile)

    pooled_sum = None
    for lp in prep['layers']:
        conv = causal_fft_conv(h, lp['k'])
        h, pooled_sum = s4_block_forward(h, conv, lp['D'], lp['W_glu'], lp['b_glu'],
                                         lp['ln_gamma'], lp['ln_beta'], l_tile)

    pooled = pooled_sum[:, 0, :] * (1.0 / L)          # mean over sequence length
    return decoder_forward(pooled, prep['dec_w'], prep['dec_b'])


# ------------------------- one-time inference preparation -------------------

def prepare_inference_params(params, L):
    """Precompute per-layer SSM kernels k (H, L) and the fused bf16 GLU weight ONCE,
    instead of rebuilding them on every forward call."""
    prep = {
        'enc_w': params['enc_w'], 'enc_b': params['enc_b'],
        'dec_w': params['dec_w'], 'dec_b': params['dec_b'],
        'layers': [],
    }
    for lp in params['layers']:
        k = s4d_ssm_kernel(lp['log_dt'], lp['log_A_real'], lp['A_imag'],
                           lp['C_re'], lp['C_im'], L)
        prep['layers'].append({
            'k': k,
            'D': lp['D'],
            'W_glu': lp['W_out'].astype(jnp.bfloat16),   # (H, 2H): [:, :H]=value, [:, H:]=gate
            'b_glu': lp['b_out'],
            'ln_gamma': lp['ln_gamma'],
            'ln_beta': lp['ln_beta'],
        })
    return prep


# ------------------------------ parameter init ------------------------------

def init_params(key, d_input, d_model, d_output, n_layers, d_state):
    H, N = d_model, d_state

    def nxt():
        nonlocal key
        key, sub = jax.random.split(key)
        return sub

    params = {
        'enc_w': jax.random.normal(nxt(), (d_input, d_model), jnp.float32) / math.sqrt(d_input),
        'enc_b': jax.random.normal(nxt(), (d_model,), jnp.float32) * 0.01,
        'dec_w': jax.random.normal(nxt(), (d_model, d_output), jnp.float32) / math.sqrt(d_model),
        'dec_b': jax.random.normal(nxt(), (d_output,), jnp.float32) * 0.01,
        'layers': [],
    }
    for _ in range(n_layers):
        lp = {
            'log_dt': (math.log(0.001)
                       + jax.random.uniform(nxt(), (H,), jnp.float32)
                       * (math.log(0.1) - math.log(0.001))),
            'log_A_real': jnp.log(0.5 * jnp.ones((H, N), jnp.float32)),
            'A_imag': math.pi * jnp.broadcast_to(jnp.arange(N, dtype=jnp.float32), (H, N)),
            'C_re': jax.random.normal(nxt(), (H, N), jnp.float32) * (0.5 ** 0.5),
            'C_im': jax.random.normal(nxt(), (H, N), jnp.float32) * (0.5 ** 0.5),
            'D': jax.random.normal(nxt(), (H,), jnp.float32),
            # Conv1d(H, 2H, 1) stored transposed so the kernel does y @ W; GLU takes
            # columns [:H] as value half and [H:] as gate half (consistent mapping).
            'W_out': jax.random.normal(nxt(), (H, 2 * H), jnp.float32) / math.sqrt(H),
            'b_out': jnp.zeros((2 * H,), jnp.float32),
            'ln_gamma': jnp.ones((H,), jnp.float32),
            'ln_beta': jnp.zeros((H,), jnp.float32),
        }
        params['layers'].append(lp)
    return params


# ----------------------------------- main ------------------------------------

if __name__ == "__main__":
    B, L = 2, 16
    d_input, d_model, d_output = 4, 128, 10   # d_model multiple of 128 -> lane-dense blocks
    n_layers, d_state = 2, 8

    root = jax.random.PRNGKey(0)
    k_params, k_input = jax.random.split(root)

    params = init_params(k_params, d_input, d_model, d_output, n_layers, d_state)
    x = jax.random.normal(k_input, (B, L, d_input), jnp.float32)

    prep = prepare_inference_params(params, L)     # one-time SSM-kernel / weight prep
    fwd = jax.jit(s4_model_forward)

    out = jax.block_until_ready(fwd(x, prep))
    assert out.shape == (B, d_output), out.shape
    assert bool(jnp.all(jnp.isfinite(out)))
    print("KERNEL_OK")
</pallas_src>

<mosaic_0001>
module attributes {stable_mosaic.version = 11 : i64} {
  func.func @_encoder_kernel(%arg0: i32, %arg1: i32, %arg2: memref<1x16x4xf32, #tpu.memory_space<vmem>>, %arg3: memref<4x128xf32, #tpu.memory_space<vmem>>, %arg4: memref<1x128xf32, #tpu.memory_space<vmem>>, %arg5: memref<1x16x128xf32, #tpu.memory_space<vmem>>) attributes {dimension_semantics = [#tpu.dimension_semantics<parallel>, #tpu.dimension_semantics<parallel>], iteration_bounds = array<i64: 2, 1>, scalar_prefetch = 0 : i64, scratch_operands = 0 : i64, tpu.core_type = #tpu.core_type<tc>, window_params = [{transform_indices = @transform_0, window_bounds = array<i64: 1, 16, 4>}, {pipeline_mode = #tpu.pipeline_mode<synchronous>, transform_indices = @transform_1, window_bounds = array<i64: 4, 128>}, {pipeline_mode = #tpu.pipeline_mode<synchronous>, transform_indices = @transform_2, window_bounds = array<i64: 1, 128>}, {transform_indices = @transform_3, window_bounds = array<i64: 1, 16, 128>}]} {
    %c0 = arith.constant 0 : index
    %c0_0 = arith.constant 0 : index
    %c0_1 = arith.constant 0 : index
    %0 = vector.load %arg2[%c0, %c0_0, %c0_1] : memref<1x16x4xf32, #tpu.memory_space<vmem>>, vector<1x16x4xf32>
    %1 = vector.shape_cast %0 : vector<1x16x4xf32> to vector<16x4xf32>
    %c0_2 = arith.constant 0 : index
    %c0_3 = arith.constant 0 : index
    %2 = vector.load %arg3[%c0_2, %c0_3] : memref<4x128xf32, #tpu.memory_space<vmem>>, vector<4x128xf32>
    %cst = arith.constant dense<0.000000e+00> : vector<16x128xf32>
    %3 = tpu.matmul %1, %2, %cst {dimension_numbers = #tpu.dot_dimension_numbers<[1], [0], [0], [1], [0, 0, 1, 1], [], []>} : vector<16x4xf32>, vector<4x128xf32>, vector<16x128xf32> -> vector<16x128xf32>
    %c0_4 = arith.constant 0 : index
    %c0_5 = arith.constant 0 : index
    %4 = vector.load %arg4[%c0_4, %c0_5] : memref<1x128xf32, #tpu.memory_space<vmem>>, vector<1x128xf32>
    %5 = vector.broadcast %4 : vector<1x128xf32> to vector<16x128xf32>
    %6 = arith.addf %3, %5 : vector<16x128xf32>
    %c0_6 = arith.constant 0 : index
    %c0_7 = arith.constant 0 : index
    %c0_8 = arith.constant 0 : index
    %7 = vector.load %arg5[%c0_6, %c0_7, %c0_8] : memref<1x16x128xf32, #tpu.memory_space<vmem>>, vector<1x16x128xf32>
    %8 = vector.shape_cast %7 : vector<1x16x128xf32> to vector<16x128xf32>
    %9 = vector.shape_cast %6 : vector<16x128xf32> to vector<1x16x128xf32>
    tpu.vector_store %arg5[%c0_6, %c0_7, %c0_8], %9 {strides = array<i32>} : memref<1x16x128xf32, #tpu.memory_space<vmem>>, vector<1x16x128xf32>,
    return
  }
  func.func @transform_0(%arg0: i32, %arg1: i32) -> (i32, i32, i32) {
    %c0_i32 = arith.constant 0 : i32
    %c0_i32_0 = arith.constant 0 : i32
    return %arg0, %arg1, %c0_i32 : i32, i32, i32
  }
  func.func @transform_1(%arg0: i32, %arg1: i32) -> (i32, i32) {
    %c0_i32 = arith.constant 0 : i32
    %c0_i32_0 = arith.constant 0 : i32
    %c0_i32_1 = arith.constant 0 : i32
    return %c0_i32, %c0_i32_0 : i32, i32
  }
  func.func @transform_2(%arg0: i32, %arg1: i32) -> (i32, i32) {
    %c0_i32 = arith.constant 0 : i32
    %c0_i32_0 = arith.constant 0 : i32
    %c0_i32_1 = arith.constant 0 : i32
    return %c0_i32, %c0_i32_0 : i32, i32
  }
  func.func @transform_3(%arg0: i32, %arg1: i32) -> (i32, i32, i32) {
    %c0_i32 = arith.constant 0 : i32
    %c0_i32_0 = arith.constant 0 : i32
    return %arg0, %arg1, %c0_i32 : i32, i32, i32
  }
}

module attributes {stable_mosaic.version = 11 : i64} {
  func.func @_s4_block_kernel(%arg0: i32, %arg1: i32, %arg2: memref<1x16x128xf32, #tpu.memory_space<vmem>>, %arg3: memref<1x16x128xf32, #tpu.memory_space<vmem>>, %arg4: memref<1x128xf32, #tpu.memory_space<vmem>>, %arg5: memref<128x256xbf16, #tpu.memory_space<vmem>>, %arg6: memref<1x256xf32, #tpu.memory_space<vmem>>, %arg7: memref<1x128xf32, #tpu.memory_space<vmem>>, %arg8: memref<1x128xf32, #tpu.memory_space<vmem>>, %arg9: memref<1x16x128xf32, #tpu.memory_space<vmem>>, %arg10: memref<1x1x128xf32, #tpu.memory_space<vmem>>) attributes {dimension_semantics = [#tpu.dimension_semantics<parallel>, #tpu.dimension_semantics<arbitrary>], iteration_bounds = array<i64: 2, 1>, scalar_prefetch = 0 : i64, scratch_operands = 0 : i64, tpu.core_type = #tpu.core_type<tc>, window_params = [{transform_indices = @transform_0, window_bounds = array<i64: 1, 16, 128>}, {transform_indices = @transform_1, window_bounds = array<i64: 1, 16, 128>}, {pipeline_mode = #tpu.pipeline_mode<synchronous>, transform_indices = @transform_2, window_bounds = array<i64: 1, 128>}, {pipeline_mode = #tpu.pipeline_mode<synchronous>, transform_indices = @transform_3, window_bounds = array<i64: 128, 256>}, {pipeline_mode = #tpu.pipeline_mode<synchronous>, transform_indices = @transform_4, window_bounds = array<i64: 1, 256>}, {pipeline_mode = #tpu.pipeline_mode<synchronous>, transform_indices = @transform_5, window_bounds = array<i64: 1, 128>}, {pipeline_mode = #tpu.pipeline_mode<synchronous>, transform_indices = @transform_6, window_bounds = array<i64: 1, 128>}, {transform_indices = @transform_7, window_bounds = array<i64: 1, 16, 128>}, {transform_indices = @transform_8, window_bounds = array<i64: 1, 1, 128>}]} {
    %c0 = arith.constant 0 : index
    %c0_0 = arith.constant 0 : index
    %c0_1 = arith.constant 0 : index
    %0 = vector.load %arg2[%c0, %c0_0, %c0_1] : memref<1x16x128xf32, #tpu.memory_space<vmem>>, vector<1x16x128xf32>
    %1 = vector.shape_cast %0 : vector<1x16x128xf32> to vector<16x128xf32>
    %c0_2 = arith.constant 0 : index
    %c0_3 = arith.constant 0 : index
    %c0_4 = arith.constant 0 : index
    %2 = vector.load %arg3[%c0_2, %c0_3, %c0_4] : memref<1x16x128xf32, #tpu.memory_space<vmem>>, vector<1x16x128xf32>
    %3 = vector.shape_cast %2 : vector<1x16x128xf32> to vector<16x128xf32>
    %c0_5 = arith.constant 0 : index
    %c0_6 = arith.constant 0 : index
    %4 = vector.load %arg4[%c0_5, %c0_6] : memref<1x128xf32, #tpu.memory_space<vmem>>, vector<1x128xf32>
    %5 = vector.broadcast %4 : vector<1x128xf32> to vector<16x128xf32>
    %6 = arith.mulf %1, %5 : vector<16x128xf32>
    %7 = arith.addf %3, %6 : vector<16x128xf32>
    %8 = arith.mulf %7, %7 : vector<16x128xf32>
    %9 = arith.mulf %7, %8 : vector<16x128xf32>
    %cst = arith.constant 4.471500e-02 : f32
    %10 = vector.broadcast %cst : f32 to vector<16x128xf32>
    %11 = arith.mulf %10, %9 : vector<16x128xf32>
    %12 = arith.addf %7, %11 : vector<16x128xf32>
    %cst_7 = arith.constant 0.797884583 : f32
    %13 = vector.broadcast %cst_7 : f32 to vector<16x128xf32>
    %14 = arith.mulf %13, %12 : vector<16x128xf32>
    %15 = math.tanh %14 : vector<16x128xf32>
    %cst_8 = arith.constant 1.000000e+00 : f32
    %16 = vector.broadcast %cst_8 : f32 to vector<16x128xf32>
    %17 = arith.addf %16, %15 : vector<16x128xf32>
    %cst_9 = arith.constant 5.000000e-01 : f32
    %18 = vector.broadcast %cst_9 : f32 to vector<16x128xf32>
    %19 = arith.mulf %18, %17 : vector<16x128xf32>
    %20 = arith.mulf %7, %19 : vector<16x128xf32>
    %21 = arith.truncf %20 : vector<16x128xf32> to vector<16x128xbf16>
    %c0_10 = arith.constant 0 : index
    %c0_11 = arith.constant 0 : index
    %22 = vector.load %arg5[%c0_10, %c0_11] : memref<128x256xbf16, #tpu.memory_space<vmem>>, vector<128x256xbf16>
    %cst_12 = arith.constant dense<0.000000e+00> : vector<16x256xf32>
    %23 = tpu.matmul %21, %22, %cst_12 {dimension_numbers = #tpu.dot_dimension_numbers<[1], [0], [0], [1], [0, 0, 1, 1], [], []>} : vector<16x128xbf16>, vector<128x256xbf16>, vector<16x256xf32> -> vector<16x256xf32>
    %c0_13 = arith.constant 0 : index
    %c0_14 = arith.constant 0 : index
    %24 = vector.load %arg6[%c0_13, %c0_14] : memref<1x256xf32, #tpu.memory_space<vmem>>, vector<1x256xf32>
    %25 = vector.broadcast %24 : vector<1x256xf32> to vector<16x256xf32>
    %26 = arith.addf %23, %25 : vector<16x256xf32>
    %27 = vector.extract_strided_slice %26 {offsets = [0, 0], sizes = [16, 128], strides = [1, 1]} : vector<16x256xf32> to vector<16x128xf32>
    %28 = vector.extract_strided_slice %26 {offsets = [0, 128], sizes = [16, 128], strides = [1, 1]} : vector<16x256xf32> to vector<16x128xf32>
    %29 = arith.negf %28 : vector<16x128xf32>
    %30 = math.exp %29 : vector<16x128xf32>
    %cst_15 = arith.constant 1.000000e+00 : f32
    %31 = vector.broadcast %cst_15 : f32 to vector<16x128xf32>
    %32 = arith.addf %31, %30 : vector<16x128xf32>
    %33 = arith.divf %31, %32 : vector<16x128xf32>
    %34 = arith.mulf %27, %33 : vector<16x128xf32>
    %35 = arith.addf %34, %1 : vector<16x128xf32>
    %cst_16 = arith.constant dense<0.000000e+00> : vector<16xf32>
    %36 = vector.multi_reduction <add>, %35, %cst_16 [1] : vector<16x128xf32> to vector<16xf32>
    %37 = vector.shape_cast %36 : vector<16xf32> to vector<16x1xf32>
    %cst_17 = arith.constant 1.280000e+02 : f32
    %38 = vector.broadcast %cst_17 : f32 to vector<16x1xf32>
    %39 = arith.divf %37, %38 : vector<16x1xf32>
    %40 = vector.broadcast %39 : vector<16x1xf32> to vector<16x128xf32>
    %41 = arith.subf %35, %40 : vector<16x128xf32>
    %42 = arith.mulf %41, %41 : vector<16x128xf32>
    %cst_18 = arith.constant dense<0.000000e+00> : vector<16xf32>
    %43 = vector.multi_reduction <add>, %42, %cst_18 [1] : vector<16x128xf32> to vector<16xf32>
    %44 = vector.shape_cast %43 : vector<16xf32> to vector<16x1xf32>
    %cst_19 = arith.constant 1.280000e+02 : f32
    %45 = vector.broadcast %cst_19 : f32 to vector<16x1xf32>
    %46 = arith.divf %44, %45 : vector<16x1xf32>
    %47 = vector.broadcast %39 : vector<16x1xf32> to vector<16x128xf32>
    %48 = arith.subf %35, %47 : vector<16x128xf32>
    %cst_20 = arith.constant 9.99999974E-6 : f32
    %49 = vector.broadcast %cst_20 : f32 to vector<16x1xf32>
    %50 = arith.addf %46, %49 : vector<16x1xf32>
    %51 = math.rsqrt %50 : vector<16x1xf32>
    %52 = vector.broadcast %51 : vector<16x1xf32> to vector<16x128xf32>
    %53 = arith.mulf %48, %52 : vector<16x128xf32>
    %c0_21 = arith.constant 0 : index
    %c0_22 = arith.constant 0 : index
    %54 = vector.load %arg7[%c0_21, %c0_22] : memref<1x128xf32, #tpu.memory_space<vmem>>, vector<1x128xf32>
    %55 = vector.broadcast %54 : vector<1x128xf32> to vector<16x128xf32>
    %56 = arith.mulf %53, %55 : vector<16x128xf32>
    %c0_23 = arith.constant 0 : index
    %c0_24 = arith.constant 0 : index
    %57 = vector.load %arg8[%c0_23, %c0_24] : memref<1x128xf32, #tpu.memory_space<vmem>>, vector<1x128xf32>
    %58 = vector.broadcast %57 : vector<1x128xf32> to vector<16x128xf32>
    %59 = arith.addf %56, %58 : vector<16x128xf32>
    %c0_25 = arith.constant 0 : index
    %c0_26 = arith.constant 0 : index
    %c0_27 = arith.constant 0 : index
    %60 = vector.load %arg9[%c0_25, %c0_26, %c0_27] : memref<1x16x128xf32, #tpu.memory_space<vmem>>, vector<1x16x128xf32>
    %61 = vector.shape_cast %60 : vector<1x16x128xf32> to vector<16x128xf32>
    %62 = vector.shape_cast %59 : vector<16x128xf32> to vector<1x16x128xf32>
    tpu.vector_store %arg9[%c0_25, %c0_26, %c0_27], %62 {strides = array<i32>} : memref<1x16x128xf32, #tpu.memory_space<vmem>>, vector<1x16x128xf32>,
    %cst_28 = arith.constant dense<0.000000e+00> : vector<128xf32>
    %63 = vector.multi_reduction <add>, %59, %cst_28 [0] : vector<16x128xf32> to vector<128xf32>
    %64 = vector.shape_cast %63 : vector<128xf32> to vector<1x128xf32>
    %65 = vector.shape_cast %64 : vector<1x128xf32> to vector<1x1x128xf32>
    %c0_i32 = arith.constant 0 : i32
    %66 = arith.cmpi eq, %arg1, %c0_i32 : i32
    %67 = arith.extui %66 : i1 to i32
    %c0_i32_29 = arith.constant 0 : i32
    %68 = arith.cmpi ne, %67, %c0_i32_29 : i32
    scf.if %68 {
      %c0_32 = arith.constant 0 : index
      %c0_33 = arith.constant 0 : index
      %c0_34 = arith.constant 0 : index
      %72 = vector.load %arg10[%c0_32, %c0_33, %c0_34] : memref<1x1x128xf32, #tpu.memory_space<vmem>>, vector<1x1x128xf32>
      tpu.vector_store %arg10[%c0_32, %c0_33, %c0_34], %65 {strides = array<i32>} : memref<1x1x128xf32, #tpu.memory_space<vmem>>, vector<1x1x128xf32>,
    } else {
    }
    %c0_i32_30 = arith.constant 0 : i32
    %69 = arith.cmpi ne, %arg1, %c0_i32_30 : i32
    %70 = arith.extui %69 : i1 to i32
    %c0_i32_31 = arith.constant 0 : i32
    %71 = arith.cmpi ne, %70, %c0_i32_31 : i32
    scf.if %71 {
      %c0_32 = arith.constant 0 : index
      %c0_33 = arith.constant 0 : index
      %c0_34 = arith.constant 0 : index
      %72 = vector.load %arg10[%c0_32, %c0_33, %c0_34] : memref<1x1x128xf32, #tpu.memory_space<vmem>>, vector<1x1x128xf32>
      %73 = arith.addf %72, %65 : vector<1x1x128xf32>
      %c0_35 = arith.constant 0 : index
      %c0_36 = arith.constant 0 : index
      %c0_37 = arith.constant 0 : index
      %74 = vector.load %arg10[%c0_35, %c0_36, %c0_37] : memref<1x1x128xf32, #tpu.memory_space<vmem>>, vector<1x1x128xf32>
      tpu.vector_store %arg10[%c0_35, %c0_36, %c0_37], %73 {strides = array<i32>} : memref<1x1x128xf32, #tpu.memory_space<vmem>>, vector<1x1x128xf32>,
    } else {
    }
    return
  }
  func.func @transform_0(%arg0: i32, %arg1: i32) -> (i32, i32, i32) {
    %c0_i32 = arith.constant 0 : i32
    %c0_i32_0 = arith.constant 0 : i32
    return %arg0, %arg1, %c0_i32 : i32, i32, i32
  }
  func.func @transform_1(%arg0: i32, %arg1: i32) -> (i32, i32, i32) {
    %c0_i32 = arith.constant 0 : i32
    %c0_i32_0 = arith.constant 0 : i32
    return %arg0, %arg1, %c0_i32 : i32, i32, i32
  }
  func.func @transform_2(%arg0: i32, %arg1: i32) -> (i32, i32) {
    %c0_i32 = arith.constant 0 : i32
    %c0_i32_0 = arith.constant 0 : i32
    %c0_i32_1 = arith.constant 0 : i32
    return %c0_i32, %c0_i32_0 : i32, i32
  }
  func.func @transform_3(%arg0: i32, %arg1: i32) -> (i32, i32) {
    %c0_i32 = arith.constant 0 : i32
    %c0_i32_0 = arith.constant 0 : i32
    %c0_i32_1 = arith.constant 0 : i32
    return %c0_i32, %c0_i32_0 : i32, i32
  }
  func.func @transform_4(%arg0: i32, %arg1: i32) -> (i32, i32) {
    %c0_i32 = arith.constant 0 : i32
    %c0_i32_0 = arith.constant 0 : i32
    %c0_i32_1 = arith.constant 0 : i32
    return %c0_i32, %c0_i32_0 : i32, i32
  }
  func.func @transform_5(%arg0: i32, %arg1: i32) -> (i32, i32) {
    %c0_i32 = arith.constant 0 : i32
    %c0_i32_0 = arith.constant 0 : i32
    %c0_i32_1 = arith.constant 0 : i32
    return %c0_i32, %c0_i32_0 : i32, i32
  }
  func.func @transform_6(%arg0: i32, %arg1: i32) -> (i32, i32) {
    %c0_i32 = arith.constant 0 : i32
    %c0_i32_0 = arith.constant 0 : i32
    %c0_i32_1 = arith.constant 0 : i32
    return %c0_i32, %c0_i32_0 : i32, i32
  }
  func.func @transform_7(%arg0: i32, %arg1: i32) -> (i32, i32, i32) {
    %c0_i32 = arith.constant 0 : i32
    %c0_i32_0 = arith.constant 0 : i32
    return %arg0, %arg1, %c0_i32 : i32, i32, i32
  }
  func.func @transform_8(%arg0: i32, %arg1: i32) -> (i32, i32, i32) {
    %c0_i32 = arith.constant 0 : i32
    %c0_i32_0 = arith.constant 0 : i32
    %c0_i32_1 = arith.constant 0 : i32
    return %arg0, %c0_i32, %c0_i32_0 : i32, i32, i32
  }
}

module attributes {stable_mosaic.version = 11 : i64} {
  func.func @_s4_block_kernel(%arg0: i32, %arg1: i32, %arg2: memref<1x16x128xf32, #tpu.memory_space<vmem>>, %arg3: memref<1x16x128xf32, #tpu.memory_space<vmem>>, %arg4: memref<1x128xf32, #tpu.memory_space<vmem>>, %arg5: memref<128x256xbf16, #tpu.memory_space<vmem>>, %arg6: memref<1x256xf32, #tpu.memory_space<vmem>>, %arg7: memref<1x128xf32, #tpu.memory_space<vmem>>, %arg8: memref<1x128xf32, #tpu.memory_space<vmem>>, %arg9: memref<1x16x128xf32, #tpu.memory_space<vmem>>, %arg10: memref<1x1x128xf32, #tpu.memory_space<vmem>>) attributes {dimension_semantics = [#tpu.dimension_semantics<parallel>, #tpu.dimension_semantics<arbitrary>], iteration_bounds = array<i64: 2, 1>, scalar_prefetch = 0 : i64, scratch_operands = 0 : i64, tpu.core_type = #tpu.core_type<tc>, window_params = [{transform_indices = @transform_0, window_bounds = array<i64: 1, 16, 128>}, {transform_indices = @transform_1, window_bounds = array<i64: 1, 16, 128>}, {pipeline_mode = #tpu.pipeline_mode<synchronous>, transform_indices = @transform_2, window_bounds = array<i64: 1, 128>}, {pipeline_mode = #tpu.pipeline_mode<synchronous>, transform_indices = @transform_3, window_bounds = array<i64: 128, 256>}, {pipeline_mode = #tpu.pipeline_mode<synchronous>, transform_indices = @transform_4, window_bounds = array<i64: 1, 256>}, {pipeline_mode = #tpu.pipeline_mode<synchronous>, transform_indices = @transform_5, window_bounds = array<i64: 1, 128>}, {pipeline_mode = #tpu.pipeline_mode<synchronous>, transform_indices = @transform_6, window_bounds = array<i64: 1, 128>}, {transform_indices = @transform_7, window_bounds = array<i64: 1, 16, 128>}, {transform_indices = @transform_8, window_bounds = array<i64: 1, 1, 128>}]} {
    %c0 = arith.constant 0 : index
    %c0_0 = arith.constant 0 : index
    %c0_1 = arith.constant 0 : index
    %0 = vector.load %arg2[%c0, %c0_0, %c0_1] : memref<1x16x128xf32, #tpu.memory_space<vmem>>, vector<1x16x128xf32>
    %1 = vector.shape_cast %0 : vector<1x16x128xf32> to vector<16x128xf32>
    %c0_2 = arith.constant 0 : index
    %c0_3 = arith.constant 0 : index
    %c0_4 = arith.constant 0 : index
    %2 = vector.load %arg3[%c0_2, %c0_3, %c0_4] : memref<1x16x128xf32, #tpu.memory_space<vmem>>, vector<1x16x128xf32>
    %3 = vector.shape_cast %2 : vector<1x16x128xf32> to vector<16x128xf32>
    %c0_5 = arith.constant 0 : index
    %c0_6 = arith.constant 0 : index
    %4 = vector.load %arg4[%c0_5, %c0_6] : memref<1x128xf32, #tpu.memory_space<vmem>>, vector<1x128xf32>
    %5 = vector.broadcast %4 : vector<1x128xf32> to vector<16x128xf32>
    %6 = arith.mulf %1, %5 : vector<16x128xf32>
    %7 = arith.addf %3, %6 : vector<16x128xf32>
    %8 = arith.mulf %7, %7 : vector<16x128xf32>
    %9 = arith.mulf %7, %8 : vector<16x128xf32>
    %cst = arith.constant 4.471500e-02 : f32
    %10 = vector.broadcast %cst : f32 to vector<16x128xf32>
    %11 = arith.mulf %10, %9 : vector<16x128xf32>
    %12 = arith.addf %7, %11 : vector<16x128xf32>
    %cst_7 = arith.constant 0.797884583 : f32
    %13 = vector.broadcast %cst_7 : f32 to vector<16x128xf32>
    %14 = arith.mulf %13, %12 : vector<16x128xf32>
    %15 = math.tanh %14 : vector<16x128xf32>
    %cst_8 = arith.constant 1.000000e+00 : f32
    %16 = vector.broadcast %cst_8 : f32 to vector<16x128xf32>
    %17 = arith.addf %16, %15 : vector<16x128xf32>
    %cst_9 = arith.constant 5.000000e-01 : f32
    %18 = vector.broadcast %cst_9 : f32 to vector<16x128xf32>
    %19 = arith.mulf %18, %17 : vector<16x128xf32>
    %20 = arith.mulf %7, %19 : vector<16x128xf32>
    %21 = arith.truncf %20 : vector<16x128xf32> to vector<16x128xbf16>
    %c0_10 = arith.constant 0 : index
    %c0_11 = arith.constant 0 : index
    %22 = vector.load %arg5[%c0_10, %c0_11] : memref<128x256xbf16, #tpu.memory_space<vmem>>, vector<128x256xbf16>
    %cst_12 = arith.constant dense<0.000000e+00> : vector<16x256xf32>
    %23 = tpu.matmul %21, %22, %cst_12 {dimension_numbers = #tpu.dot_dimension_numbers<[1], [0], [0], [1], [0, 0, 1, 1], [], []>} : vector<16x128xbf16>, vector<128x256xbf16>, vector<16x256xf32> -> vector<16x256xf32>
    %c0_13 = arith.constant 0 : index
    %c0_14 = arith.constant 0 : index
    %24 = vector.load %arg6[%c0_13, %c0_14] : memref<1x256xf32, #tpu.memory_space<vmem>>, vector<1x256xf32>
    %25 = vector.broadcast %24 : vector<1x256xf32> to vector<16x256xf32>
    %26 = arith.addf %23, %25 : vector<16x256xf32>
    %27 = vector.extract_strided_slice %26 {offsets = [0, 0], sizes = [16, 128], strides = [1, 1]} : vector<16x256xf32> to vector<16x128xf32>
    %28 = vector.extract_strided_slice %26 {offsets = [0, 128], sizes = [16, 128], strides = [1, 1]} : vector<16x256xf32> to vector<16x128xf32>
    %29 = arith.negf %28 : vector<16x128xf32>
    %30 = math.exp %29 : vector<16x128xf32>
    %cst_15 = arith.constant 1.000000e+00 : f32
    %31 = vector.broadcast %cst_15 : f32 to vector<16x128xf32>
    %32 = arith.addf %31, %30 : vector<16x128xf32>
    %33 = arith.divf %31, %32 : vector<16x128xf32>
    %34 = arith.mulf %27, %33 : vector<16x128xf32>
    %35 = arith.addf %34, %1 : vector<16x128xf32>
    %cst_16 = arith.constant dense<0.000000e+00> : vector<16xf32>
    %36 = vector.multi_reduction <add>, %35, %cst_16 [1] : vector<16x128xf32> to vector<16xf32>
    %37 = vector.shape_cast %36 : vector<16xf32> to vector<16x1xf32>
    %cst_17 = arith.constant 1.280000e+02 : f32
    %38 = vector.broadcast %cst_17 : f32 to vector<16x1xf32>
    %39 = arith.divf %37, %38 : vector<16x1xf32>
    %40 = vector.broadcast %39 : vector<16x1xf32> to vector<16x128xf32>
    %41 = arith.subf %35, %40 : vector<16x128xf32>
    %42 = arith.mulf %41, %41 : vector<16x128xf32>
    %cst_18 = arith.constant dense<0.000000e+00> : vector<16xf32>
    %43 = vector.multi_reduction <add>, %42, %cst_18 [1] : vector<16x128xf32> to vector<16xf32>
    %44 = vector.shape_cast %43 : vector<16xf32> to vector<16x1xf32>
    %cst_19 = arith.constant 1.280000e+02 : f32
    %45 = vector.broadcast %cst_19 : f32 to vector<16x1xf32>
    %46 = arith.divf %44, %45 : vector<16x1xf32>
    %47 = vector.broadcast %39 : vector<16x1xf32> to vector<16x128xf32>
    %48 = arith.subf %35, %47 : vector<16x128xf32>
    %cst_20 = arith.constant 9.99999974E-6 : f32
    %49 = vector.broadcast %cst_20 : f32 to vector<16x1xf32>
    %50 = arith.addf %46, %49 : vector<16x1xf32>
    %51 = math.rsqrt %50 : vector<16x1xf32>
    %52 = vector.broadcast %51 : vector<16x1xf32> to vector<16x128xf32>
    %53 = arith.mulf %48, %52 : vector<16x128xf32>
    %c0_21 = arith.constant 0 : index
    %c0_22 = arith.constant 0 : index
    %54 = vector.load %arg7[%c0_21, %c0_22] : memref<1x128xf32, #tpu.memory_space<vmem>>, vector<1x128xf32>
    %55 = vector.broadcast %54 : vector<1x128xf32> to vector<16x128xf32>
    %56 = arith.mulf %53, %55 : vector<16x128xf32>
    %c0_23 = arith.constant 0 : index
    %c0_24 = arith.constant 0 : index
    %57 = vector.load %arg8[%c0_23, %c0_24] : memref<1x128xf32, #tpu.memory_space<vmem>>, vector<1x128xf32>
    %58 = vector.broadcast %57 : vector<1x128xf32> to vector<16x128xf32>
    %59 = arith.addf %56, %58 : vector<16x128xf32>
    %c0_25 = arith.constant 0 : index
    %c0_26 = arith.constant 0 : index
    %c0_27 = arith.constant 0 : index
    %60 = vector.load %arg9[%c0_25, %c0_26, %c0_27] : memref<1x16x128xf32, #tpu.memory_space<vmem>>, vector<1x16x128xf32>
    %61 = vector.shape_cast %60 : vector<1x16x128xf32> to vector<16x128xf32>
    %62 = vector.shape_cast %59 : vector<16x128xf32> to vector<1x16x128xf32>
    tpu.vector_store %arg9[%c0_25, %c0_26, %c0_27], %62 {strides = array<i32>} : memref<1x16x128xf32, #tpu.memory_space<vmem>>, vector<1x16x128xf32>,
    %cst_28 = arith.constant dense<0.000000e+00> : vector<128xf32>
    %63 = vector.multi_reduction <add>, %59, %cst_28 [0] : vector<16x128xf32> to vector<128xf32>
    %64 = vector.shape_cast %63 : vector<128xf32> to vector<1x128xf32>
    %65 = vector.shape_cast %64 : vector<1x128xf32> to vector<1x1x128xf32>
    %c0_i32 = arith.constant 0 : i32
    %66 = arith.cmpi eq, %arg1, %c0_i32 : i32
    %67 = arith.extui %66 : i1 to i32
    %c0_i32_29 = arith.constant 0 : i32
    %68 = arith.cmpi ne, %67, %c0_i32_29 : i32
    scf.if %68 {
      %c0_32 = arith.constant 0 : index
      %c0_33 = arith.constant 0 : index
      %c0_34 = arith.constant 0 : index
      %72 = vector.load %arg10[%c0_32, %c0_33, %c0_34] : memref<1x1x128xf32, #tpu.memory_space<vmem>>, vector<1x1x128xf32>
      tpu.vector_store %arg10[%c0_32, %c0_33, %c0_34], %65 {strides = array<i32>} : memref<1x1x128xf32, #tpu.memory_space<vmem>>, vector<1x1x128xf32>,
    } else {
    }
    %c0_i32_30 = arith.constant 0 : i32
    %69 = arith.cmpi ne, %arg1, %c0_i32_30 : i32
    %70 = arith.extui %69 : i1 to i32
    %c0_i32_31 = arith.constant 0 : i32
    %71 = arith.cmpi ne, %70, %c0_i32_31 : i32
    scf.if %71 {
      %c0_32 = arith.constant 0 : index
      %c0_33 = arith.constant 0 : index
      %c0_34 = arith.constant 0 : index
      %72 = vector.load %arg10[%c0_32, %c0_33, %c0_34] : memref<1x1x128xf32, #tpu.memory_space<vmem>>, vector<1x1x128xf32>
      %73 = arith.addf %72, %65 : vector<1x1x128xf32>
      %c0_35 = arith.constant 0 : index
      %c0_36 = arith.constant 0 : index
      %c0_37 = arith.constant 0 : index
      %74 = vector.load %arg10[%c0_35, %c0_36, %c0_37] : memref<1x1x128xf32, #tpu.memory_space<vmem>>, vector<1x1x128xf32>
      tpu.vector_store %arg10[%c0_35, %c0_36, %c0_37], %73 {strides = array<i32>} : memref<1x1x128xf32, #tpu.memory_space<vmem>>, vector<1x1x128xf32>,
    } else {
    }
    return
  }
  func.func @transform_0(%arg0: i32, %arg1: i32) -> (i32, i32, i32) {
    %c0_i32 = arith.constant 0 : i32
    %c0_i32_0 = arith.constant 0 : i32
    return %arg0, %arg1, %c0_i32 : i32, i32, i32
  }
  func.func @transform_1(%arg0: i32, %arg1: i32) -> (i32, i32, i32) {
    %c0_i32 = arith.constant 0 : i32
    %c0_i32_0 = arith.constant 0 : i32
    return %arg0, %arg1, %c0_i32 : i32, i32, i32
  }
  func.func @transform_2(%arg0: i32, %arg1: i32) -> (i32, i32) {
    %c0_i32 = arith.constant 0 : i32
    %c0_i32_0 = arith.constant 0 : i32
    %c0_i32_1 = arith.constant 0 : i32
    return %c0_i32, %c0_i32_0 : i32, i32
  }
  func.func @transform_3(%arg0: i32, %arg1: i32) -> (i32, i32) {
    %c0_i32 = arith.constant 0 : i32
    %c0_i32_0 = arith.constant 0 : i32
    %c0_i32_1 = arith.constant 0 : i32
    return %c0_i32, %c0_i32_0 : i32, i32
  }
  func.func @transform_4(%arg0: i32, %arg1: i32) -> (i32, i32) {
    %c0_i32 = arith.constant 0 : i32
    %c0_i32_0 = arith.constant 0 : i32
    %c0_i32_1 = arith.constant 0 : i32
    return %c0_i32, %c0_i32_0 : i32, i32
  }
  func.func @transform_5(%arg0: i32, %arg1: i32) -> (i32, i32) {
    %c0_i32 = arith.constant 0 : i32
    %c0_i32_0 = arith.constant 0 : i32
    %c0_i32_1 = arith.constant 0 : i32
    return %c0_i32, %c0_i32_0 : i32, i32
  }
  func.func @transform_6(%arg0: i32, %arg1: i32) -> (i32, i32) {
    %c0_i32 = arith.constant 0 : i32
    %c0_i32_0 = arith.constant 0 : i32
    %c0_i32_1 = arith.constant 0 : i32
    return %c0_i32, %c0_i32_0 : i32, i32
  }
  func.func @transform_7(%arg0: i32, %arg1: i32) -> (i32, i32, i32) {
    %c0_i32 = arith.constant 0 : i32
    %c0_i32_0 = arith.constant 0 : i32
    return %arg0, %arg1, %c0_i32 : i32, i32, i32
  }
  func.func @transform_8(%arg0: i32, %arg1: i32) -> (i32, i32, i32) {
    %c0_i32 = arith.constant 0 : i32
    %c0_i32_0 = arith.constant 0 : i32
    %c0_i32_1 = arith.constant 0 : i32
    return %arg0, %c0_i32, %c0_i32_0 : i32, i32, i32
  }
}

module attributes {stable_mosaic.version = 11 : i64} {
  func.func @_decoder_kernel(%arg0: i32, %arg1: memref<2x128xf32, #tpu.memory_space<vmem>>, %arg2: memref<128x10xf32, #tpu.memory_space<vmem>>, %arg3: memref<1x10xf32, #tpu.memory_space<vmem>>, %arg4: memref<2x10xf32, #tpu.memory_space<vmem>>) attributes {dimension_semantics = [#tpu.dimension_semantics<arbitrary>], iteration_bounds = array<i64: 1>, scalar_prefetch = 0 : i64, scratch_operands = 0 : i64, tpu.core_type = #tpu.core_type<tc>, window_params = [{pipeline_mode = #tpu.pipeline_mode<synchronous>, transform_indices = @transform_0, window_bounds = array<i64: 2, 128>}, {pipeline_mode = #tpu.pipeline_mode<synchronous>, transform_indices = @transform_1, window_bounds = array<i64: 128, 10>}, {pipeline_mode = #tpu.pipeline_mode<synchronous>, transform_indices = @transform_2, window_bounds = array<i64: 1, 10>}, {pipeline_mode = #tpu.pipeline_mode<synchronous>, transform_indices = @transform_3, window_bounds = array<i64: 2, 10>}]} {
    %c0 = arith.constant 0 : index
    %c0_0 = arith.constant 0 : index
    %0 = vector.load %arg1[%c0, %c0_0] : memref<2x128xf32, #tpu.memory_space<vmem>>, vector<2x128xf32>
    %c0_1 = arith.constant 0 : index
    %c0_2 = arith.constant 0 : index
    %1 = vector.load %arg2[%c0_1, %c0_2] : memref<128x10xf32, #tpu.memory_space<vmem>>, vector<128x10xf32>
    %cst = arith.constant dense<0.000000e+00> : vector<2x10xf32>
    %2 = tpu.matmul %0, %1, %cst {dimension_numbers = #tpu.dot_dimension_numbers<[1], [0], [0], [1], [0, 0, 1, 1], [], []>} : vector<2x128xf32>, vector<128x10xf32>, vector<2x10xf32> -> vector<2x10xf32>
    %c0_3 = arith.constant 0 : index
    %c0_4 = arith.constant 0 : index
    %3 = vector.load %arg3[%c0_3, %c0_4] : memref<1x10xf32, #tpu.memory_space<vmem>>, vector<1x10xf32>
    %4 = vector.broadcast %3 : vector<1x10xf32> to vector<2x10xf32>
    %5 = arith.addf %2, %4 : vector<2x10xf32>
    %c0_5 = arith.constant 0 : index
    %c0_6 = arith.constant 0 : index
    %6 = vector.load %arg4[%c0_5, %c0_6] : memref<2x10xf32, #tpu.memory_space<vmem>>, vector<2x10xf32>
    tpu.vector_store %arg4[%c0_5, %c0_6], %5 {strides = array<i32>} : memref<2x10xf32, #tpu.memory_space<vmem>>, vector<2x10xf32>,
    return
  }
  func.func @transform_0(%arg0: i32) -> (i32, i32) {
    %c0_i32 = arith.constant 0 : i32
    %c0_i32_0 = arith.constant 0 : i32
    %c0_i32_1 = arith.constant 0 : i32
    return %c0_i32, %c0_i32_0 : i32, i32
  }
  func.func @transform_1(%arg0: i32) -> (i32, i32) {
    %c0_i32 = arith.constant 0 : i32
    %c0_i32_0 = arith.constant 0 : i32
    %c0_i32_1 = arith.constant 0 : i32
    return %c0_i32, %c0_i32_0 : i32, i32
  }
  func.func @transform_2(%arg0: i32) -> (i32, i32) {
    %c0_i32 = arith.constant 0 : i32
    %c0_i32_0 = arith.constant 0 : i32
    %c0_i32_1 = arith.constant 0 : i32
    return %c0_i32, %c0_i32_0 : i32, i32
  }
  func.func @transform_3(%arg0: i32) -> (i32, i32) {
    %c0_i32 = arith.constant 0 : i32
    %c0_i32_0 = arith.constant 0 : i32
    %c0_i32_1 = arith.constant 0 : i32
    return %c0_i32, %c0_i32_0 : i32, i32
  }
}

</mosaic_0001>

<llo_original>
// kernel: reverse.4
$region0: #{reverse.4}
  %s0 = inlined_call_operand.vmem [shape: f32[2,128,15], index: 0, kind: input, shape index: {}]
  %s1 = inlined_call_operand.vmem [shape: f32[2,128,15], index: 1, kind: output, shape index: {}]
  $region1: #{reverse.4} parent=0
    #allocation0 [shape = 'u8[24576]{0}', space=vmem, size = 0x6000, scoped, tag = 'operand span for operand 0']
    #allocation1 [shape = 'u8[16384]{0}', space=vmem, size = 0x4000, scoped, tag = 'operand span for operand 1']
    %s2 = scalar_lea.vmem [#allocation0], 8
    // Predicated region
    $region2: #{reverse.4} parent=1 // pred_check
      _
    $region3: #{reverse.4} parent=1 // pred_check_branch
      %4 = sbr.rel (0) target = $region5
    $region4: #{reverse.4} parent=1 // pred_region
      // Predicated region
      $region6: #{reverse.4} parent=4 // pred_check
        _
      $region7: #{reverse.4} parent=4 // pred_check_branch
        %6 = sbr.rel (0) target = $region9
      $region8: #{reverse.4} parent=4 // pred_region
        // Predicated region
        $region21: #{reverse.4} parent=8 // pred_check
          _
        $region22: #{reverse.4} parent=8 // pred_check_branch
          %27 = sbr.rel (0) target = $region24
        $region23: #{reverse.4} parent=8 // pred_region
          loop: start=0, step=1, limit=1
          $region25: #{reverse.4} parent=23 // loop_pre_header
            _
          $region26: #{reverse.4} parent=23 // loop_header
            %s29 = sphi 0, %s33
            %p30 = scmp.ge.s32.totalorder %s29, 1
            %s34 = sphi %s0, %s0
            %s35 = sphi %s2, %s2
          $region27: #{reverse.4} parent=23 // loop_header_branch
            %32 = sbr.rel (%p30) target = $region31
          $region28: #{reverse.4} parent=23 // loop_body
            %v36 = vld [vmem:[%s34] sm:$0xff]
            %37 = vst [vmem:[%s35] sm:$0xff] %v36
            %v38 = vld [vmem:[%s34 + $0x8] sm:$0xff]
            %39 = vst [vmem:[%s35 + $0x8] sm:$0xff] %v38
            %v40 = vld [vmem:[%s34 + $0x10] sm:$0xff]
            %41 = vst [vmem:[%s35 + $0x18] sm:$0xff] %v40
            %v42 = vld [vmem:[%s34 + $0x18] sm:$0xff]
            %43 = vst [vmem:[%s35 + $0x20] sm:$0xff] %v42
          $region29: #{reverse.4} parent=23 // loop_footer
            %s33 = sadd.s32 1, %s29
          $region30: #{reverse.4} parent=23 // loop_footer_branch
            %28 = sbr.rel target = $region26
          $region31: #{reverse.4} parent=23 // loop_exit
            _
        $region24: #{reverse.4} parent=8 // pred_fallthru
          _
        // Predicated region
        $region32: #{reverse.4} parent=8 // pred_check
          _
        $region33: #{reverse.4} parent=8 // pred_check_branch
          %45 = sbr.rel target = $region35
        $region34: #{reverse.4} parent=8 // pred_region
          _
        $region35: #{reverse.4} parent=8 // pred_fallthru
          _
      $region9: #{reverse.4} parent=4 // pred_fallthru
        _
      // Predicated region
      $region10: #{reverse.4} parent=4 // pred_check
        _
      $region11: #{reverse.4} parent=4 // pred_check_branch
        %8 = sbr.rel target = $region13
      $region12: #{reverse.4} parent=4 // pred_region
        loop: start=0, step=1, limit=1
        $region14: #{reverse.4} parent=12 // loop_pre_header
          _
        $region15: #{reverse.4} parent=12 // loop_header
          %s11 = sphi 0, %s15
          %p12 = scmp.ge.s32.totalorder %s11, 1
          %s16 = sphi %s0, %s0
          %s17 = sphi %s2, %s2
        $region16: #{reverse.4} parent=12 // loop_header_branch
          %14 = sbr.rel (%p12) target = $region20
        $region17: #{reverse.4} parent=12 // loop_body
          %v18 = vld [vmem:[%s16] sm:$0xff]
          %19 = vst [vmem:[%s17] sm:$0xff] %v18
          %v20 = vld [vmem:[%s16 + $0x8] sm:$0xff]
          %21 = vst [vmem:[%s17 + $0x8] sm:$0xff] %v20
          %v22 = vld [vmem:[%s16 + $0x10] sm:$0xff]
          %23 = vst [vmem:[%s17 + $0x18] sm:$0xff] %v22
          %v24 = vld [vmem:[%s16 + $0x18] sm:$0xff]
          %25 = vst [vmem:[%s17 + $0x20] sm:$0xff] %v24
        $region18: #{reverse.4} parent=12 // loop_footer
          %s15 = sadd.s32 1, %s11
        $region19: #{reverse.4} parent=12 // loop_footer_branch
          %10 = sbr.rel target = $region15
        $region20: #{reverse.4} parent=12 // loop_exit
          _
      $region13: #{reverse.4} parent=4 // pred_fallthru
        _
    $region5: #{reverse.4} parent=1 // pred_fallthru
      _
    %46 = vnop
    %s47 = scalar_lea.vmem [#allocation0], 8
    %s48 = scalar_lea.vmem %s47, 7 [#allocation0]
    %v49 = vld [vmem:[%s48] ss:$-1 sm:$0xff]
    %v50 = vrot.slane %v49, 1
    %51 = vst [vmem:[#allocation1] sm:$0xff] %v50
    %s52 = scalar_lea.vmem [#allocation0], 16
    %s53 = scalar_lea.vmem %s52, 7 [#allocation0]
    %v54 = vld [vmem:[%s53] ss:$-1 sm:$0xff]
    %v55 = vrot.slane %v54, 1
    %v56 = vlaneseq
    %v57 = vshrl.u32 %v56, 7
    %vm58 = vcmp.lt.s32.totalorder %v57, 7
    %59 = vst.msk [vmem:[#allocation1] sm:$0xff] %vm58, %v55
    %s60 = scalar_lea.vmem [#allocation1], 8
    %s61 = scalar_lea.vmem [#allocation0], 7
    %v62 = vld [vmem:[%s61] ss:$-1 sm:$0xff]
    %v63 = vrot.slane %v62, 1
    %64 = vst [vmem:[%s60] sm:$0xff] %v63
    %s65 = scalar_lea.vmem [#allocation0], 8
    %s66 = scalar_lea.vmem %s65, 7 [#allocation0]
    %v67 = vld [vmem:[%s66] ss:$-1 sm:$0xff]
    %v68 = vrot.slane %v67, 1
    %v69 = vlaneseq
    %v70 = vshrl.u32 %v69, 7
    %vm71 = vcmp.lt.s32.totalorder %v70, 7
    %72 = vst.msk [vmem:[%s60] sm:$0xff] %vm71, %v68
    %s73 = scalar_lea.vmem [#allocation1], 16
    %s74 = scalar_lea.vmem [#allocation0], 24
    %s75 = scalar_lea.vmem %s74, 8 [#allocation0]
    %s76 = scalar_lea.vmem %s75, 7 [#allocation0]
    %v77 = vld [vmem:[%s76] ss:$-1 sm:$0xff]
    %v78 = vrot.slane %v77, 1
    %79 = vst [vmem:[%s73] sm:$0xff] %v78
    %s80 = scalar_lea.vmem %s74, 16 [#allocation0]
    %s81 = scalar_lea.vmem %s80, 7 [#allocation0]
    %v82 = vld [vmem:[%s81] ss:$-1 sm:$0xff]
    %v83 = vrot.slane %v82, 1
    %v84 = vlaneseq
    %v85 = vshrl.u32 %v84, 7
    %vm86 = vcmp.lt.s32.totalorder %v85, 7
    %87 = vst.msk [vmem:[%s73] sm:$0xff] %vm86, %v83
    %s88 = scalar_lea.vmem %s73, 8 [#allocation1]
    %s89 = scalar_lea.vmem %s74, 7 [#allocation0]
    %v90 = vld [vmem:[%s89] ss:$-1 sm:$0xff]
    %v91 = vrot.slane %v90, 1
    %92 = vst [vmem:[%s88] sm:$0xff] %v91
    %s93 = scalar_lea.vmem %s74, 8 [#allocation0]
    %s94 = scalar_lea.vmem %s93, 7 [#allocation0]
    %v95 = vld [vmem:[%s94] ss:$-1 sm:$0xff]
    %v96 = vrot.slane %v95, 1
    %v97 = vlaneseq
    %v98 = vshrl.u32 %v97, 7
    %vm99 = vcmp.lt.s32.totalorder %v98, 7
    %100 = vst.msk [vmem:[%s88] sm:$0xff] %vm99, %v96
    // Predicated region
    $region36: #{reverse.4} parent=1 // pred_check
      _
    $region37: #{reverse.4} parent=1 // pred_check_branch
      %102 = sbr.rel (0) target = $region39
    $region38: #{reverse.4} parent=1 // pred_region
      // Predicated region
      $region40: #{reverse.4} parent=38 // pred_check
        _
      $region41: #{reverse.4} parent=38 // pred_check_branch
        %104 = sbr.rel (0) target = $region43
      $region42: #{reverse.4} parent=38 // pred_region
        // Predicated region
        $region55: #{reverse.4} parent=42 // pred_check
          _
        $region56: #{reverse.4} parent=42 // pred_check_branch
          %125 = sbr.rel (0) target = $region58
        $region57: #{reverse.4} parent=42 // pred_region
          loop: start=0, step=1, limit=1
          $region59: #{reverse.4} parent=57 // loop_pre_header
            _
          $region60: #{reverse.4} parent=57 // loop_header
            %s127 = sphi 0, %s131
            %p128 = scmp.ge.s32.totalorder %s127, 1
            %s132 = sphi [#allocation1], [#allocation1]
            %s133 = sphi %s1, %s1
          $region61: #{reverse.4} parent=57 // loop_header_branch
            %130 = sbr.rel (%p128) target = $region65
          $region62: #{reverse.4} parent=57 // loop_body
            %v134 = vld [vmem:[%s132] sm:$0xff]
            %135 = vst [vmem:[%s133] sm:$0xff] %v134
            %v136 = vld [vmem:[%s132 + $0x8] sm:$0xff]
            %137 = vst [vmem:[%s133 + $0x8] sm:$0xff] %v136
            %v138 = vld [vmem:[%s132 + $0x10] sm:$0xff]
            %139 = vst [vmem:[%s133 + $0x10] sm:$0xff] %v138
            %v140 = vld [vmem:[%s132 + $0x18] sm:$0xff]
            %141 = vst [vmem:[%s133 + $0x18] sm:$0xff] %v140
          $region63: #{reverse.4} parent=57 // loop_footer
            %s131 = sadd.s32 1, %s127
          $region64: #{reverse.4} parent=57 // loop_footer_branch
            %126 = sbr.rel target = $region60
          $region65: #{reverse.4} parent=57 // loop_exit
            _
        $region58: #{reverse.4} parent=42 // pred_fallthru
          _
        // Predicated region
        $region66: #{reverse.4} parent=42 // pred_check
          _
        $region67: #{reverse.4} parent=42 // pred_check_branch
          %143 = sbr.rel target = $region69
        $region68: #{reverse.4} parent=42 // pred_region
          _
        $region69: #{reverse.4} parent=42 // pred_fallthru
          _
      $region43: #{reverse.4} parent=38 // pred_fallthru
        _
      // Predicated region
      $region44: #{reverse.4} parent=38 // pred_check
        _
      $region45: #{reverse.4} parent=38 // pred_check_branch
        %106 = sbr.rel target = $region47
      $region46: #{reverse.4} parent=38 // pred_region
        loop: start=0, step=1, limit=1
        $region48: #{reverse.4} parent=46 // loop_pre_header
          _
        $region49: #{reverse.4} parent=46 // loop_header
          %s109 = sphi 0, %s113
          %p110 = scmp.ge.s32.totalorder %s109, 1
          %s114 = sphi [#allocation1], [#allocation1]
          %s115 = sphi %s1, %s1
        $region50: #{reverse.4} parent=46 // loop_header_branch
          %112 = sbr.rel (%p110) target = $region54
        $region51: #{reverse.4} parent=46 // loop_body
          %v116 = vld [vmem:[%s114] sm:$0xff]
          %117 = vst [vmem:[%s115] sm:$0xff] %v116
          %v118 = vld [vmem:[%s114 + $0x8] sm:$0xff]
          %119 = vst [vmem:[%s115 + $0x8] sm:$0xff] %v118
          %v120 = vld [vmem:[%s114 + $0x10] sm:$0xff]
          %121 = vst [vmem:[%s115 + $0x10] sm:$0xff] %v120
          %v122 = vld [vmem:[%s114 + $0x18] sm:$0xff]
          %123 = vst [vmem:[%s115 + $0x18] sm:$0xff] %v122
        $region52: #{reverse.4} parent=46 // loop_footer
          %s113 = sadd.s32 1, %s109
        $region53: #{reverse.4} parent=46 // loop_footer_branch
          %108 = sbr.rel target = $region49
        $region54: #{reverse.4} parent=46 // loop_exit
          _
      $region47: #{reverse.4} parent=38 // pred_fallthru
        _
    $region39: #{reverse.4} parent=1 // pred_fallthru
      _
    %144 = vnop

// kernel: s4_model_forward.4
$region0: #{s4_model_forward.4}
  #allocation0 [shape = 'u32[]', space=smem, size = 0x4, offset = 0x4, fixed_abs, tag = 'smem constant byte address 0x4 - core index']
  #allocation1 [shape = 'u32[144,128]{1,0:T(1,128)}', space=vmem, size = 0x12000, scoped, tag = 'internal scratch']
  %s0 = inlined_call_operand.vmem [shape: f32[2,16,4], index: 0, kind: input, shape index: {}]
  %s1 = inlined_call_operand.vmem [shape: f32[4,128], index: 1, kind: input, shape index: {}]
  %s2 = inlined_call_operand.vmem [shape: f32[1,128], index: 2, kind: input, shape index: {}]
  %s3 = inlined_call_operand.vmem [shape: f32[2,16,128], index: 3, kind: output, shape index: {}]
  %s4 = sld [smem:[#allocation0]]
  $region45: #{s4_model_forward.4} parent=0
    _
  %s6 = ssub.s32 1, %s4
  %s7 = scalar_select 0, %s6, %s4
  loop: start=0, step=1, limit=4
  $region2: #{s4_model_forward.4} parent=0 // loop_pre_header
    _
  $region3: #{s4_model_forward.4} parent=0 // loop_header
    %s9 = sphi 0, %s13
    %p10 = scmp.ge.s32.totalorder %s9, 4
    %s16 = sphi 0, %s28
    %s17 = sphi 0, %s24
    %s18 = sphi 0, %s16
    %s19 = sphi 0, %s17
    %s20 = sphi 0, %s18
    %s21 = sphi 0, %s19
    %s33 = sphi 0, %s35
    %s36 = sphi 0, %s33
    %s37 = sphi 0, %s36
    %s53 = sphi 0, %s37
    %s57 = sphi 0, %s57
    %s59 = sphi 0, %s57
    %s60 = sphi 0, %s59
    %s74 = sphi 0, %s60
    %s78 = sphi 0, %s78
    %s80 = sphi 0, %s78
    %s81 = sphi 0, %s80
    %s95 = sphi 0, %s81
    %s103 = sphi 0, %s105
    %s106 = sphi 0, %s103
    %s107 = sphi 0, %s106
    %s123 = sphi 0, %s107
  $region4: #{s4_model_forward.4} parent=0 // loop_header_branch
    %12 = sbr.rel (%p10) target = $region8
  $region5: #{s4_model_forward.4} parent=0 // loop_body
    %s14 = ssub.s32 %s9, 1
    %s15 = ssub.s32 %s9, 2
    %s22 = sadd.s32 1, %s17
    %p23 = scmp.ge.s32.totalorder %s22, 1
    %s24 = scalar_select %p23, 0, %s22
    %s25 = sadd.s32 1, %s16
    %s26 = scalar_select %p23, %s25, %s16
    %p27 = scmp.ge.s32.totalorder %s26, 2
    %s28 = scalar_select %p27, 0, %s26
    %s29 = ssub.s32 %s16, %s28
    %s30 = ssub.s32 %s17, %s24
    %s31 = sor.u32 %s29, %s30
    %p32 = scmp.eq.s32.totalorder %s31, 0
    %s34 = sadd.s32 %s33, 1
    %s35 = scalar_select %p32, %s33, %s34
    %p38 = pneg %p32
    %p39 = scmp.eq.s32.totalorder %s9, 1
    %p40 = por %p38, %p39
    %p41 = scmp.ne.s32.totalorder %s33, %s36
    %p42 = scmp.eq.s32.totalorder %s9, 0
    %p43 = por %p41, %p42
    %p44 = scmp.ne.s32.totalorder %s33, %s36
    %p45 = scmp.eq.s32.totalorder %s14, 1
    %p46 = por %p44, %p45
    %p47 = scmp.ne.s32.totalorder %s36, %s37
    %p48 = scmp.eq.s32.totalorder %s14, 0
    %p49 = por %p47, %p48
    %p50 = scmp.ne.s32.totalorder %s36, %s37
    %p51 = scmp.eq.s32.totalorder %s15, 1
    %p52 = por %p50, %p51
    %p54 = scmp.ne.s32.totalorder %s37, %s53
    %p55 = scmp.eq.s32.totalorder %s15, 0
    %p56 = por %p54, %p55
    %s58 = sadd.s32 %s57, 1
    %p61 = scmp.eq.s32.totalorder %s9, 1
    %p62 = scmp.ne.s32.totalorder %s57, %s59
    %p63 = scmp.eq.s32.totalorder %s9, 0
    %p64 = por %p62, %p63
    %p65 = scmp.ne.s32.totalorder %s57, %s59
    %p66 = scmp.eq.s32.totalorder %s14, 1
    %p67 = por %p65, %p66
    %p68 = scmp.ne.s32.totalorder %s59, %s60
    %p69 = scmp.eq.s32.totalorder %s14, 0
    %p70 = por %p68, %p69
    %p71 = scmp.ne.s32.totalorder %s59, %s60
    %p72 = scmp.eq.s32.totalorder %s15, 1
    %p73 = por %p71, %p72
    %p75 = scmp.ne.s32.totalorder %s60, %s74
    %p76 = scmp.eq.s32.totalorder %s15, 0
    %p77 = por %p75, %p76
    %s79 = sadd.s32 %s78, 1
    %p82 = scmp.eq.s32.totalorder %s9, 1
    %p83 = scmp.ne.s32.totalorder %s78, %s80
    %p84 = scmp.eq.s32.totalorder %s9, 0
    %p85 = por %p83, %p84
    %p86 = scmp.ne.s32.totalorder %s78, %s80
    %p87 = scmp.eq.s32.totalorder %s14, 1
    %p88 = por %p86, %p87
    %p89 = scmp.ne.s32.totalorder %s80, %s81
    %p90 = scmp.eq.s32.totalorder %s14, 0
    %p91 = por %p89, %p90
    %p92 = scmp.ne.s32.totalorder %s80, %s81
    %p93 = scmp.eq.s32.totalorder %s15, 1
    %p94 = por %p92, %p93
    %p96 = scmp.ne.s32.totalorder %s81, %s95
    %p97 = scmp.eq.s32.totalorder %s15, 0
    %p98 = por %p96, %p97
    %s99 = ssub.s32 %s16, %s28
    %s100 = ssub.s32 %s17, %s24
    %s101 = sor.u32 %s99, %s100
    %p102 = scmp.eq.s32.totalorder %s101, 0
    %s104 = sadd.s32 %s103, 1
    %s105 = scalar_select %p102, %s103, %s104
    %p108 = pneg %p102
    %p109 = scmp.eq.s32.totalorder %s9, 1
    %p110 = por %p108, %p109
    %p111 = scmp.ne.s32.totalorder %s103, %s106
    %p112 = scmp.eq.s32.totalorder %s9, 0
    %p113 = por %p111, %p112
    %p114 = scmp.ne.s32.totalorder %s103, %s106
    %p115 = scmp.eq.s32.totalorder %s14, 1
    %p116 = por %p114, %p115
    %p117 = scmp.ne.s32.totalorder %s106, %s107
    %p118 = scmp.eq.s32.totalorder %s14, 0
    %p119 = por %p117, %p118
    %p120 = scmp.ne.s32.totalorder %s106, %s107
    %p121 = scmp.eq.s32.totalorder %s15, 1
    %p122 = por %p120, %p121
    %p124 = scmp.ne.s32.totalorder %s107, %s123
    %p125 = scmp.eq.s32.totalorder %s15, 0
    %p126 = por %p124, %p125
    %p127 = scmp.le.s32.totalorder 1, %s9
    %p128 = scmp.lt.s32.totalorder %s9, 3
    %p129 = pnand %p127, %p128
    %p130 = pneg %p129
    // Predicated region
    $region9: #{s4_model_forward.4} parent=5 // pred_check
      _
    $region10: #{s4_model_forward.4} parent=5 // pred_check_branch
      %132 = sbr.rel (%p129) target = $region12
    $region11: #{s4_model_forward.4} parent=5 // pred_region
      %s133 = ssub.s32 %s9, 1
      // Predicated region
      $region13: #{s4_model_forward.4} parent=11 // pred_check
        %p134 = pneg %p70
      $region14: #{s4_model_forward.4} parent=11 // pred_check_branch
        %136 = sbr.rel (%p134) target = $region16
      $region15: #{s4_model_forward.4} parent=11 // pred_region
        _
      $region16: #{s4_model_forward.4} parent=11 // pred_fallthru
        _
      // Predicated region
      $region17: #{s4_model_forward.4} parent=11 // pred_check
        %p137 = pneg %p91
      $region18: #{s4_model_forward.4} parent=11 // pred_check_branch
        %139 = sbr.rel (%p137) target = $region20
      $region19: #{s4_model_forward.4} parent=11 // pred_region
        _
      $region20: #{s4_model_forward.4} parent=11 // pred_fallthru
        _
    $region12: #{s4_model_forward.4} parent=5 // pred_fallthru
      _
    %p140 = scmp.lt.s32.totalorder %s9, 2
    // Predicated region
    $region21: #{s4_model_forward.4} parent=5 // pred_check
      %p141 = pneg %p140
    $region22: #{s4_model_forward.4} parent=5 // pred_check_branch
      %143 = sbr.rel (%p141) target = $region24
    $region23: #{s4_model_forward.4} parent=5 // pred_region
      // Predicated region
      $region25: #{s4_model_forward.4} parent=23 // pred_check
        %p144 = pneg %p43
      $region26: #{s4_model_forward.4} parent=23 // pred_check_branch
        %146 = sbr.rel (%p144) target = $region28
      $region27: #{s4_model_forward.4} parent=23 // pred_region
        %s147 = smul.u32 2, %s17
        %p148 = scmp.lt.s32.totalorder %s16, 1
        %s149 = scalar_select %p148, %s16, 1
        %p150 = scmp.lt.s32.totalorder %s147, 1
        %s151 = scalar_select %p150, %s147, 1
        %s152 = smul.addr %s149, 2
        %s153 = sadd.s32 %s151, %s152
        %s154 = smul.addr %s153, 8
        %s155 = scalar_lea.vmem %s0, %s154
        %s156 = smul.u32 2, %s17
      $region28: #{s4_model_forward.4} parent=23 // pred_fallthru
        _
    $region24: #{s4_model_forward.4} parent=5 // pred_fallthru
      _
    %p157 = scmp.le.s32.totalorder 1, %s9
    %p158 = scmp.lt.s32.totalorder %s9, 3
    %p159 = pnand %p157, %p158
    %p160 = pneg %p159
    // Predicated region
    $region29: #{s4_model_forward.4} parent=5 // pred_check
      _
    $region30: #{s4_model_forward.4} parent=5 // pred_check_branch
      %162 = sbr.rel (%p159) target = $region32
    $region31: #{s4_model_forward.4} parent=5 // pred_region
      %s163 = ssub.s32 %s9, 1
      %s164 = smul.u32 2, %s19
      %p165 = scmp.lt.s32.totalorder %s18, 1
      %s166 = scalar_select %p165, %s18, 1
      %p167 = scmp.lt.s32.totalorder %s164, 1
      %s168 = scalar_select %p167, %s164, 1
      %s169 = smul.addr %s166, 2
      %s170 = sadd.s32 %s168, %s169
      %s171 = smul.addr %s170, 8
      %s172 = scalar_lea.vmem %s0, %s171
      %p173 = pneg %p49
      %p174 = pneg %p46
      %p175 = pneg %p70
      %p176 = pneg %p67
      %p177 = pneg %p91
      %p178 = pneg %p88
      %p179 = pneg %p119
      %p180 = pneg %p116
      %s181 = smul.u32 2, %s19
      %p182 = scmp.lt.s32.totalorder %s18, 1
      %s183 = scalar_select %p182, %s18, 1
      %p184 = scmp.lt.s32.totalorder %s181, 1
      %s185 = scalar_select %p184, %s181, 1
      %s186 = smul.addr %s183, 2
      %s187 = sadd.s32 %s185, %s186
      %s188 = smul.addr %s187, 8
      %s189 = scalar_lea.vmem %s3, %s188
      %s190 = smul.u32 2, %s19
      %p191 = scmp.lt.s32.totalorder %s18, 1
      %s192 = scalar_select %p191, %s18, 1
      %p193 = scmp.lt.s32.totalorder %s190, 1
      %s194 = scalar_select %p193, %s190, 1
      %s195 = smul.addr %s192, 2
      %s196 = sadd.s32 %s194, %s195
      %s197 = smul.addr %s196, 8
      %s198 = scalar_lea.vmem %s0, %s197
      %s199 = smul.u32 2, %s19
      %s200 = smul.u32 2, %s19
      %p201 = scmp.lt.s32.totalorder %s18, 1
      %s202 = scalar_select %p201, %s18, 1
      %p203 = scmp.lt.s32.totalorder %s200, 1
      %s204 = scalar_select %p203, %s200, 1
      %s205 = smul.addr %s202, 2
      %s206 = sadd.s32 %s204, %s205
      %s207 = smul.addr %s206, 8
      %s208 = scalar_lea.vmem %s3, %s207
      %s209 = smul.u32 2, %s19
      %v210 = vld [vmem:[%s198] sm:$0xff]
      %v211 = vld [vmem:[%s198 + $0x8] sm:$0xff]
      %v212 = vld [vmem:[%s1] sm:$0xf]
      %v213 = vld [vmem:[%s2] sm:$0x1]
      %v215 = vlaneseq
      %v216 = vshrl.u32 %v215, 7
      %v217 = vsub.s32 0, %v216
      %v218 = vrot.slane %v213, %v217
      %vm220 = vcmask 31744
      %v222 = vsel %vm220, %v210, 0
      %v225 = vsel %vm220, %v211, 0
      %vm227 = vcmask 1043456
      %v229 = vsel %vm227, %v212, 0
      %231 = vmatprep.subr.mxu0 0.0
      %232 = vmatpush1.msra.mxu0 %v229
      %233 = vmatprep.subr.mxu0 0.0
      %234 = vmatpush1.msra.mxu0 0.0
      %235 = vmatprep.subr.mxu0 0.0
      %236 = vmatpush1.msra.mxu0 0.0
      %237 = vmatprep.subr.mxu0 0.0
      %238 = vmatpush1.msra.mxu0 0.0
      %239 = vmatprep.subr.mxu0 0.0
      %240 = vmatpush1.msra.mxu0 0.0
      %241 = vmatprep.subr.mxu0 0.0
      %242 = vmatpush1.msra.mxu0 0.0
      %243 = vmatprep.subr.mxu0 0.0
      %244 = vmatpush1.msra.mxu0 0.0
      %245 = vmatprep.subr.mxu0 0.0
      %246 = vmatpush1.msra.mxu0 0.0
      %247 = vmatprep.subr.mxu0 0.0
      %248 = vmatpush1.msra.mxu0 0.0
      %249 = vmatprep.subr.mxu0 0.0
      %250 = vmatpush1.msra.mxu0 0.0
      %251 = vmatprep.subr.mxu0 0.0
      %252 = vmatpush1.msra.mxu0 0.0
      %253 = vmatprep.subr.mxu0 0.0
      %254 = vmatpush1.msra.mxu0 0.0
      %255 = vmatprep.subr.mxu0 0.0
      %256 = vmatpush1.msra.mxu0 0.0
      %257 = vmatprep.subr.mxu0 0.0
      %258 = vmatpush1.msra.mxu0 0.0
      %259 = vmatprep.subr.mxu0 0.0
      %260 = vmatpush1.msra.mxu0 0.0
      %261 = vmatprep.subr.mxu0 0.0
      %262 = vmatpush1.msra.mxu0 0.0
      %263 = vmatprep.subr.mxu0 0.0
      %264 = vmatpush1.msra.mxu0 0.0
      %265 = vmatprep.subr.mxu0 0.0
      %266 = vmatpush1.msra.mxu0 0.0
      %267 = vmatprep.subr.mxu0 0.0
      %268 = vmatpush1.msra.mxu0 0.0
      %269 = vmatprep.subr.mxu0 0.0
      %270 = vmatpush1.msra.mxu0 0.0
      %271 = vmatprep.subr.mxu0 0.0
      %272 = vmatpush1.msra.mxu0 0.0
      %273 = vmatprep.subr.mxu0 0.0
      %274 = vmatpush1.msra.mxu0 0.0
      %275 = vmatprep.subr.mxu0 0.0
      %276 = vmatpush1.msra.mxu0 0.0
      %277 = vmatprep.subr.mxu0 0.0
      %278 = vmatpush1.msra.mxu0 0.0
      %279 = vmatprep.subr.mxu0 0.0
      %280 = vmatpush1.msra.mxu0 0.0
      %281 = vmatprep.subr.mxu0 0.0
      %282 = vmatpush1.msra.mxu0 0.0
      %283 = vmatprep.subr.mxu0 0.0
      %284 = vmatpush1.msra.mxu0 0.0
      %285 = vmatprep.subr.mxu0 0.0
      %286 = vmatpush1.msra.mxu0 0.0
      %287 = vmatprep.subr.mxu0 0.0
      %288 = vmatpush1.msra.mxu0 0.0
      %289 = vmatprep.subr.mxu0 0.0
      %290 = vmatpush1.msra.mxu0 0.0
      %291 = vmatprep.subr.mxu0 0.0
      %292 = vmatpush1.msra.mxu0 0.0
      %293 = vmatprep.subr.mxu0 0.0
      %294 = vmatpush1.msra.mxu0 0.0
      %295 = vmatprep.mubr.f32.mxu0 0.0
      %296 = vmatmul.mubr.f32.gmra.mrb[0].mxu0 %v222
      %v297 = vpop.f32.mrb[0].mxu0
      %v298 = vadd.f32 %v218, %v297
      %v299 = vpop.f32.mrb[0].mxu0
      %300 = vmatprep.mubr.f32.mxu0 0.0
      %301 = vmatmul.mubr.f32.gmra.mrb[0].mxu0 %v225
      %v302 = vpop.f32.mrb[0].mxu0
      %v303 = vadd.f32 %v218, %v302
      %v304 = vpop.f32.mrb[0].mxu0
      %305 = vdwg.mxu0
      %306 = vst [vmem:[%s208] sm:$0xff] %v298
      %307 = vst [vmem:[%s208 + $0x8] sm:$0xff] %v303
      %s308 = smul.u32 2, %s19
      %p309 = scmp.lt.s32.totalorder %s18, 1
      %s310 = scalar_select %p309, %s18, 1
      %p311 = scmp.lt.s32.totalorder %s308, 1
      %s312 = scalar_select %p311, %s308, 1
      %s313 = smul.addr %s310, 2
      %s314 = sadd.s32 %s312, %s313
      %s315 = smul.addr %s314, 8
      %s316 = scalar_lea.vmem %s3, %s315
      // Predicated region
      $region33: #{s4_model_forward.4} parent=31 // pred_check
        %p317 = pneg %p116
      $region34: #{s4_model_forward.4} parent=31 // pred_check_branch
        %319 = sbr.rel (%p317) target = $region36
      $region35: #{s4_model_forward.4} parent=31 // pred_region
        %s320 = smul.u32 2, %s19
      $region36: #{s4_model_forward.4} parent=31 // pred_fallthru
        _
    $region32: #{s4_model_forward.4} parent=5 // pred_fallthru
      _
    %p321 = scmp.le.s32.totalorder 2, %s9
    // Predicated region
    $region37: #{s4_model_forward.4} parent=5 // pred_check
      %p322 = pneg %p321
    $region38: #{s4_model_forward.4} parent=5 // pred_check_branch
      %324 = sbr.rel (%p322) target = $region40
    $region39: #{s4_model_forward.4} parent=5 // pred_region
      %s325 = ssub.s32 %s9, 2
      // Predicated region
      $region41: #{s4_model_forward.4} parent=39 // pred_check
        %p326 = pneg %p122
      $region42: #{s4_model_forward.4} parent=39 // pred_check_branch
        %328 = sbr.rel (%p326) target = $region44
      $region43: #{s4_model_forward.4} parent=39 // pred_region
        %s329 = smul.u32 2, %s21
        %p330 = scmp.lt.s32.totalorder %s20, 1
        %s331 = scalar_select %p330, %s20, 1
        %p332 = scmp.lt.s32.totalorder %s329, 1
        %s333 = scalar_select %p332, %s329, 1
        %s334 = smul.addr %s331, 2
        %s335 = sadd.s32 %s333, %s334
        %s336 = smul.addr %s335, 8
        %s337 = scalar_lea.vmem %s3, %s336
      $region44: #{s4_model_forward.4} parent=39 // pred_fallthru
        _
    $region40: #{s4_model_forward.4} parent=5 // pred_fallthru
      _
  $region6: #{s4_model_forward.4} parent=0 // loop_footer
    %s13 = sadd.s32 1, %s9
  $region7: #{s4_model_forward.4} parent=0 // loop_footer_branch
    %8 = sbr.rel target = $region3
  $region8: #{s4_model_forward.4} parent=0 // loop_exit
    _

// kernel: s4_model_forward.7
$region0: #{s4_model_forward.7}
  #allocation0 [shape = 'u32[]', space=smem, size = 0x4, offset = 0x4, fixed_abs, tag = 'smem constant byte address 0x4 - core index']
  #allocation1 [shape = 'u32[144,128]{1,0:T(1,128)}', space=vmem, size = 0x12000, scoped, tag = 'internal scratch']
  %s0 = inlined_call_operand.vmem [shape: f32[2,128], index: 0, kind: input, shape index: {}]
  %s1 = inlined_call_operand.vmem [shape: f32[128,10], index: 1, kind: input, shape index: {}]
  %s2 = inlined_call_operand.vmem [shape: f32[1,10], index: 2, kind: input, shape index: {}]
  %s3 = inlined_call_operand.hbm [shape: f32[2,10], index: 3, kind: output, shape index: {}]
  %s4 = sld [smem:[#allocation0]]
  $region22: #{s4_model_forward.7} parent=0
    _
  %s6 = ssub.s32 1, %s4
  %s7 = scalar_select 0, %s6, %s4
  $region1: #{s4_model_forward.7} parent=0
    #allocation2 [shape = 'u8[1024]{0}', space=vmem, size = 0x400, scoped, tag = 'output window, operand 0, single buffered']
    #allocation3 [shape = 's32[1]{0}', space=sflag, size = 0x4, scoped, tag = 'scoped memory for s4_model_forward.7']
    %8 = vsyncpa [#allocation3], 0
    // Predicated region
    $region2: #{s4_model_forward.7} parent=1 // pred_check
      _
    $region3: #{s4_model_forward.7} parent=1 // pred_check_branch
      %10 = sbr.rel (0) target = $region5
    $region4: #{s4_model_forward.7} parent=1 // pred_region
      _
    $region5: #{s4_model_forward.7} parent=1 // pred_fallthru
      _
    // Predicated region
    $region6: #{s4_model_forward.7} parent=1 // pred_check
      _
    $region7: #{s4_model_forward.7} parent=1 // pred_check_branch
      %12 = sbr.rel (0) target = $region9
    $region8: #{s4_model_forward.7} parent=1 // pred_region
      _
    $region9: #{s4_model_forward.7} parent=1 // pred_fallthru
      _
    // Predicated region
    $region10: #{s4_model_forward.7} parent=1 // pred_check
      _
    $region11: #{s4_model_forward.7} parent=1 // pred_check_branch
      %14 = sbr.rel (0) target = $region13
    $region12: #{s4_model_forward.7} parent=1 // pred_region
      _
    $region13: #{s4_model_forward.7} parent=1 // pred_fallthru
      _
    %v15 = vld [vmem:[%s0] sm:$0x3]
    %v16 = vld [vmem:[%s1] sm:$0xff]
    %v17 = vld [vmem:[%s1 + $0x8] sm:$0xff]
    %v18 = vld [vmem:[%s1 + $0x10] sm:$0xff]
    %v19 = vld [vmem:[%s1 + $0x18] sm:$0xff]
    %v20 = vld [vmem:[%s1 + $0x20] sm:$0xff]
    %v21 = vld [vmem:[%s1 + $0x28] sm:$0xff]
    %v22 = vld [vmem:[%s1 + $0x30] sm:$0xff]
    %v23 = vld [vmem:[%s1 + $0x38] sm:$0xff]
    %v24 = vld [vmem:[%s1 + $0x40] sm:$0xff]
    %v25 = vld [vmem:[%s1 + $0x48] sm:$0xff]
    %v26 = vld [vmem:[%s1 + $0x50] sm:$0xff]
    %v27 = vld [vmem:[%s1 + $0x58] sm:$0xff]
    %v28 = vld [vmem:[%s1 + $0x60] sm:$0xff]
    %v29 = vld [vmem:[%s1 + $0x68] sm:$0xff]
    %v30 = vld [vmem:[%s1 + $0x70] sm:$0xff]
    %v31 = vld [vmem:[%s1 + $0x78] sm:$0xff]
    %v32 = vld [vmem:[%s2] sm:$0x1]
    %v34 = vlaneseq
    %v35 = vshrl.u32 %v34, 7
    %v36 = vsub.s32 0, %v35
    %v37 = vrot.slane %v32, %v36
    %39 = vmatprep.subr.mxu0 0.0
    %40 = vmatpush1.msra.mxu0 %v16
    %41 = vmatprep.subr.mxu0 0.0
    %42 = vmatpush1.msra.mxu0 %v17
    %43 = vmatprep.subr.mxu0 0.0
    %44 = vmatpush1.msra.mxu0 %v18
    %45 = vmatprep.subr.mxu0 0.0
    %46 = vmatpush1.msra.mxu0 %v19
    %47 = vmatprep.subr.mxu0 0.0
    %48 = vmatpush1.msra.mxu0 %v20
    %49 = vmatprep.subr.mxu0 0.0
    %50 = vmatpush1.msra.mxu0 %v21
    %51 = vmatprep.subr.mxu0 0.0
    %52 = vmatpush1.msra.mxu0 %v22
    %53 = vmatprep.subr.mxu0 0.0
    %54 = vmatpush1.msra.mxu0 %v23
    %55 = vmatprep.subr.mxu0 0.0
    %56 = vmatpush1.msra.mxu0 %v24
    %57 = vmatprep.subr.mxu0 0.0
    %58 = vmatpush1.msra.mxu0 %v25
    %59 = vmatprep.subr.mxu0 0.0
    %60 = vmatpush1.msra.mxu0 %v26
    %61 = vmatprep.subr.mxu0 0.0
    %62 = vmatpush1.msra.mxu0 %v27
    %63 = vmatprep.subr.mxu0 0.0
    %64 = vmatpush1.msra.mxu0 %v28
    %65 = vmatprep.subr.mxu0 0.0
    %66 = vmatpush1.msra.mxu0 %v29
    %67 = vmatprep.subr.mxu0 0.0
    %68 = vmatpush1.msra.mxu0 %v30
    %69 = vmatprep.subr.mxu0 0.0
    %70 = vmatpush1.msra.mxu0 %v31
    %71 = vmatprep.subr.mxu0 0.0
    %72 = vmatpush1.msra.mxu0 0.0
    %73 = vmatprep.subr.mxu0 0.0
    %74 = vmatpush1.msra.mxu0 0.0
    %75 = vmatprep.subr.mxu0 0.0
    %76 = vmatpush1.msra.mxu0 0.0
    %77 = vmatprep.subr.mxu0 0.0
    %78 = vmatpush1.msra.mxu0 0.0
    %79 = vmatprep.subr.mxu0 0.0
    %80 = vmatpush1.msra.mxu0 0.0
    %81 = vmatprep.subr.mxu0 0.0
    %82 = vmatpush1.msra.mxu0 0.0
    %83 = vmatprep.subr.mxu0 0.0
    %84 = vmatpush1.msra.mxu0 0.0
    %85 = vmatprep.subr.mxu0 0.0
    %86 = vmatpush1.msra.mxu0 0.0
    %87 = vmatprep.subr.mxu0 0.0
    %88 = vmatpush1.msra.mxu0 0.0
    %89 = vmatprep.subr.mxu0 0.0
    %90 = vmatpush1.msra.mxu0 0.0
    %91 = vmatprep.subr.mxu0 0.0
    %92 = vmatpush1.msra.mxu0 0.0
    %93 = vmatprep.subr.mxu0 0.0
    %94 = vmatpush1.msra.mxu0 0.0
    %95 = vmatprep.subr.mxu0 0.0
    %96 = vmatpush1.msra.mxu0 0.0
    %97 = vmatprep.subr.mxu0 0.0
    %98 = vmatpush1.msra.mxu0 0.0
    %99 = vmatprep.subr.mxu0 0.0
    %100 = vmatpush1.msra.mxu0 0.0
    %101 = vmatprep.subr.mxu0 0.0
    %102 = vmatpush1.msra.mxu0 0.0
    %103 = vmatprep.mubr.f32.mxu0 0.0
    %104 = vmatmul.mubr.f32.gmra.mrb[0].mxu0 %v15
    %v105 = vpop.f32.mrb[0].mxu0
    %v106 = vadd.f32 %v37, %v105
    %v107 = vpop.f32.mrb[0].mxu0
    %108 = vdwg.mxu0
    %vm109 = vcmask 74752
    %110 = vst.msk [vmem:[#allocation2] sm:$0x3] %vm109, %v106
    // Predicated region
    $region14: #{s4_model_forward.7} parent=1 // pred_check
      _
    $region15: #{s4_model_forward.7} parent=1 // pred_check_branch
      %112 = sbr.rel (0) target = $region17
    $region16: #{s4_model_forward.7} parent=1 // pred_region
      %s114 = ssub.s32 32, 32
      %115 = vsyncadd [#allocation3], %s114
      %s117 = sshll.u32 [#allocation2], 4
      %s118 = int_to_ptr.vmem [resolvable:$true] %s117
      %120 = dma.vmem_to_hbm [thread:$0]  %s118, 32, %s3, [#allocation3]
    $region17: #{s4_model_forward.7} parent=1 // pred_fallthru
      _
    // Predicated region
    $region18: #{s4_model_forward.7} parent=1 // pred_check
      _
    $region19: #{s4_model_forward.7} parent=1 // pred_check_branch
      %122 = sbr.rel (0) target = $region21
    $region20: #{s4_model_forward.7} parent=1 // pred_region
      %123 = dma.done [#allocation3], 32
    $region21: #{s4_model_forward.7} parent=1 // pred_fallthru
      _
    %124 = vsyncpa [#allocation3], 1

// kernel: s4_model_forward.6
$region0: #{s4_model_forward.6}
  #allocation0 [shape = 'u32[]', space=smem, size = 0x4, offset = 0x4, fixed_abs, tag = 'smem constant byte address 0x4 - core index']
  #allocation1 [shape = 'u32[144,128]{1,0:T(1,128)}', space=vmem, size = 0x12000, scoped, tag = 'internal scratch']
  %s0 = inlined_call_operand.vmem [shape: f32[2,16,128], index: 0, kind: input, shape index: {}]
  %s1 = inlined_call_operand.vmem [shape: f32[2,16,128], index: 1, kind: input, shape index: {}]
  %s2 = inlined_call_operand.vmem [shape: f32[1,128], index: 2, kind: input, shape index: {}]
  %s3 = inlined_call_operand.vmem [shape: bf16[128,256], index: 3, kind: input, shape index: {}]
  %s4 = inlined_call_operand.vmem [shape: f32[1,256], index: 4, kind: input, shape index: {}]
  %s5 = inlined_call_operand.vmem [shape: f32[1,128], index: 5, kind: input, shape index: {}]
  %s6 = inlined_call_operand.vmem [shape: f32[1,128], index: 6, kind: input, shape index: {}]
  %s7 = inlined_call_operand.hbm [shape: f32[2,16,128], index: 7, kind: output, shape index: {0}]
  %s8 = inlined_call_operand.vmem [shape: f32[2,1,128], index: 8, kind: output, shape index: {1}]
  %9 = xla_tuple %s7, %s8
  %s10 = sld [smem:[#allocation0]]
  $region77: #{s4_model_forward.6} parent=0
    _
  %s12 = ssub.s32 1, %s10
  %s13 = scalar_select 0, %s12, %s10
  $region1: #{s4_model_forward.6} parent=0
    #allocation2 [shape = 'u8[16384]{0}', space=vmem, size = 0x4000, scoped, tag = 'output window, operand 0']
    #allocation3 [shape = 's32[2]{0}', space=sflag, size = 0x8, scoped, tag = 'scoped memory for s4_model_forward.6']
    %14 = vsyncpa [#allocation3], 0
    %s15 = scalar_lea.sflag [#allocation3], 1
    %16 = vsyncpa %s15, 0
    loop: start=0, step=1, limit=4
    $region2: #{s4_model_forward.6} parent=1 // loop_pre_header
      _
    $region3: #{s4_model_forward.6} parent=1 // loop_header
      %s18 = sphi 0, %s22
      %p19 = scmp.ge.s32.totalorder %s18, 4
      %s25 = sphi 0, %s37
      %s26 = sphi 0, %s33
      %s27 = sphi 0, %s25
      %s28 = sphi 0, %s26
      %s29 = sphi 0, %s27
      %s30 = sphi 0, %s28
      %s42 = sphi 0, %s44
      %s45 = sphi 0, %s42
      %s46 = sphi 0, %s45
      %s62 = sphi 0, %s46
      %s70 = sphi 0, %s72
      %s73 = sphi 0, %s70
      %s74 = sphi 0, %s73
      %s90 = sphi 0, %s74
      %s94 = sphi 0, %s94
      %s96 = sphi 0, %s94
      %s97 = sphi 0, %s96
      %s111 = sphi 0, %s97
      %s115 = sphi 0, %s115
      %s117 = sphi 0, %s115
      %s118 = sphi 0, %s117
      %s132 = sphi 0, %s118
      %s136 = sphi 0, %s136
      %s138 = sphi 0, %s136
      %s139 = sphi 0, %s138
      %s153 = sphi 0, %s139
      %s157 = sphi 0, %s157
      %s159 = sphi 0, %s157
      %s160 = sphi 0, %s159
      %s174 = sphi 0, %s160
      %s178 = sphi 0, %s178
      %s180 = sphi 0, %s178
      %s181 = sphi 0, %s180
      %s195 = sphi 0, %s181
      %s203 = sphi 0, %s205
      %s206 = sphi 0, %s203
      %s207 = sphi 0, %s206
      %s223 = sphi 0, %s207
      %s229 = sphi 0, %s231
      %s232 = sphi 0, %s229
      %s233 = sphi 0, %s232
      %s249 = sphi 0, %s233
    $region4: #{s4_model_forward.6} parent=1 // loop_header_branch
      %21 = sbr.rel (%p19) target = $region8
    $region5: #{s4_model_forward.6} parent=1 // loop_body
      %s23 = ssub.s32 %s18, 1
      %s24 = ssub.s32 %s18, 2
      %s31 = sadd.s32 1, %s26
      %p32 = scmp.ge.s32.totalorder %s31, 1
      %s33 = scalar_select %p32, 0, %s31
      %s34 = sadd.s32 1, %s25
      %s35 = scalar_select %p32, %s34, %s25
      %p36 = scmp.ge.s32.totalorder %s35, 2
      %s37 = scalar_select %p36, 0, %s35
      %s38 = ssub.s32 %s25, %s37
      %s39 = ssub.s32 %s26, %s33
      %s40 = sor.u32 %s38, %s39
      %p41 = scmp.eq.s32.totalorder %s40, 0
      %s43 = sadd.s32 %s42, 1
      %s44 = scalar_select %p41, %s42, %s43
      %p47 = pneg %p41
      %p48 = scmp.eq.s32.totalorder %s18, 1
      %p49 = por %p47, %p48
      %p50 = scmp.ne.s32.totalorder %s42, %s45
      %p51 = scmp.eq.s32.totalorder %s18, 0
      %p52 = por %p50, %p51
      %p53 = scmp.ne.s32.totalorder %s42, %s45
      %p54 = scmp.eq.s32.totalorder %s23, 1
      %p55 = por %p53, %p54
      %p56 = scmp.ne.s32.totalorder %s45, %s46
      %p57 = scmp.eq.s32.totalorder %s23, 0
      %p58 = por %p56, %p57
      %p59 = scmp.ne.s32.totalorder %s45, %s46
      %p60 = scmp.eq.s32.totalorder %s24, 1
      %p61 = por %p59, %p60
      %p63 = scmp.ne.s32.totalorder %s46, %s62
      %p64 = scmp.eq.s32.totalorder %s24, 0
      %p65 = por %p63, %p64
      %s66 = ssub.s32 %s25, %s37
      %s67 = ssub.s32 %s26, %s33
      %s68 = sor.u32 %s66, %s67
      %p69 = scmp.eq.s32.totalorder %s68, 0
      %s71 = sadd.s32 %s70, 1
      %s72 = scalar_select %p69, %s70, %s71
      %p75 = pneg %p69
      %p76 = scmp.eq.s32.totalorder %s18, 1
      %p77 = por %p75, %p76
      %p78 = scmp.ne.s32.totalorder %s70, %s73
      %p79 = scmp.eq.s32.totalorder %s18, 0
      %p80 = por %p78, %p79
      %p81 = scmp.ne.s32.totalorder %s70, %s73
      %p82 = scmp.eq.s32.totalorder %s23, 1
      %p83 = por %p81, %p82
      %p84 = scmp.ne.s32.totalorder %s73, %s74
      %p85 = scmp.eq.s32.totalorder %s23, 0
      %p86 = por %p84, %p85
      %p87 = scmp.ne.s32.totalorder %s73, %s74
      %p88 = scmp.eq.s32.totalorder %s24, 1
      %p89 = por %p87, %p88
      %p91 = scmp.ne.s32.totalorder %s74, %s90
      %p92 = scmp.eq.s32.totalorder %s24, 0
      %p93 = por %p91, %p92
      %s95 = sadd.s32 %s94, 1
      %p98 = scmp.eq.s32.totalorder %s18, 1
      %p99 = scmp.ne.s32.totalorder %s94, %s96
      %p100 = scmp.eq.s32.totalorder %s18, 0
      %p101 = por %p99, %p100
      %p102 = scmp.ne.s32.totalorder %s94, %s96
      %p103 = scmp.eq.s32.totalorder %s23, 1
      %p104 = por %p102, %p103
      %p105 = scmp.ne.s32.totalorder %s96, %s97
      %p106 = scmp.eq.s32.totalorder %s23, 0
      %p107 = por %p105, %p106
      %p108 = scmp.ne.s32.totalorder %s96, %s97
      %p109 = scmp.eq.s32.totalorder %s24, 1
      %p110 = por %p108, %p109
      %p112 = scmp.ne.s32.totalorder %s97, %s111
      %p113 = scmp.eq.s32.totalorder %s24, 0
      %p114 = por %p112, %p113
      %s116 = sadd.s32 %s115, 1
      %p119 = scmp.eq.s32.totalorder %s18, 1
      %p120 = scmp.ne.s32.totalorder %s115, %s117
      %p121 = scmp.eq.s32.totalorder %s18, 0
      %p122 = por %p120, %p121
      %p123 = scmp.ne.s32.totalorder %s115, %s117
      %p124 = scmp.eq.s32.totalorder %s23, 1
      %p125 = por %p123, %p124
      %p126 = scmp.ne.s32.totalorder %s117, %s118
      %p127 = scmp.eq.s32.totalorder %s23, 0
      %p128 = por %p126, %p127
      %p129 = scmp.ne.s32.totalorder %s117, %s118
      %p130 = scmp.eq.s32.totalorder %s24, 1
      %p131 = por %p129, %p130
      %p133 = scmp.ne.s32.totalorder %s118, %s132
      %p134 = scmp.eq.s32.totalorder %s24, 0
      %p135 = por %p133, %p134
      %s137 = sadd.s32 %s136, 1
      %p140 = scmp.eq.s32.totalorder %s18, 1
      %p141 = scmp.ne.s32.totalorder %s136, %s138
      %p142 = scmp.eq.s32.totalorder %s18, 0
      %p143 = por %p141, %p142
      %p144 = scmp.ne.s32.totalorder %s136, %s138
      %p145 = scmp.eq.s32.totalorder %s23, 1
      %p146 = por %p144, %p145
      %p147 = scmp.ne.s32.totalorder %s138, %s139
      %p148 = scmp.eq.s32.totalorder %s23, 0
      %p149 = por %p147, %p148
      %p150 = scmp.ne.s32.totalorder %s138, %s139
      %p151 = scmp.eq.s32.totalorder %s24, 1
      %p152 = por %p150, %p151
      %p154 = scmp.ne.s32.totalorder %s139, %s153
      %p155 = scmp.eq.s32.totalorder %s24, 0
      %p156 = por %p154, %p155
      %s158 = sadd.s32 %s157, 1
      %p161 = scmp.eq.s32.totalorder %s18, 1
      %p162 = scmp.ne.s32.totalorder %s157, %s159
      %p163 = scmp.eq.s32.totalorder %s18, 0
      %p164 = por %p162, %p163
      %p165 = scmp.ne.s32.totalorder %s157, %s159
      %p166 = scmp.eq.s32.totalorder %s23, 1
      %p167 = por %p165, %p166
      %p168 = scmp.ne.s32.totalorder %s159, %s160
      %p169 = scmp.eq.s32.totalorder %s23, 0
      %p170 = por %p168, %p169
      %p171 = scmp.ne.s32.totalorder %s159, %s160
      %p172 = scmp.eq.s32.totalorder %s24, 1
      %p173 = por %p171, %p172
      %p175 = scmp.ne.s32.totalorder %s160, %s174
      %p176 = scmp.eq.s32.totalorder %s24, 0
      %p177 = por %p175, %p176
      %s179 = sadd.s32 %s178, 1
      %p182 = scmp.eq.s32.totalorder %s18, 1
      %p183 = scmp.ne.s32.totalorder %s178, %s180
      %p184 = scmp.eq.s32.totalorder %s18, 0
      %p185 = por %p183, %p184
      %p186 = scmp.ne.s32.totalorder %s178, %s180
      %p187 = scmp.eq.s32.totalorder %s23, 1
      %p188 = por %p186, %p187
      %p189 = scmp.ne.s32.totalorder %s180, %s181
      %p190 = scmp.eq.s32.totalorder %s23, 0
      %p191 = por %p189, %p190
      %p192 = scmp.ne.s32.totalorder %s180, %s181
      %p193 = scmp.eq.s32.totalorder %s24, 1
      %p194 = por %p192, %p193
      %p196 = scmp.ne.s32.totalorder %s181, %s195
      %p197 = scmp.eq.s32.totalorder %s24, 0
      %p198 = por %p196, %p197
      %s199 = ssub.s32 %s25, %s37
      %s200 = ssub.s32 %s26, %s33
      %s201 = sor.u32 %s199, %s200
      %p202 = scmp.eq.s32.totalorder %s201, 0
      %s204 = sadd.s32 %s203, 1
      %s205 = scalar_select %p202, %s203, %s204
      %p208 = pneg %p202
      %p209 = scmp.eq.s32.totalorder %s18, 1
      %p210 = por %p208, %p209
      %p211 = scmp.ne.s32.totalorder %s203, %s206
      %p212 = scmp.eq.s32.totalorder %s18, 0
      %p213 = por %p211, %p212
      %p214 = scmp.ne.s32.totalorder %s203, %s206
      %p215 = scmp.eq.s32.totalorder %s23, 1
      %p216 = por %p214, %p215
      %p217 = scmp.ne.s32.totalorder %s206, %s207
      %p218 = scmp.eq.s32.totalorder %s23, 0
      %p219 = por %p217, %p218
      %p220 = scmp.ne.s32.totalorder %s206, %s207
      %p221 = scmp.eq.s32.totalorder %s24, 1
      %p222 = por %p220, %p221
      %p224 = scmp.ne.s32.totalorder %s207, %s223
      %p225 = scmp.eq.s32.totalorder %s24, 0
      %p226 = por %p224, %p225
      %s227 = ssub.s32 %s25, %s37
      %p228 = scmp.eq.s32.totalorder %s227, 0
      %s230 = sadd.s32 %s229, 1
      %s231 = scalar_select %p228, %s229, %s230
      %p234 = pneg %p228
      %p235 = scmp.eq.s32.totalorder %s18, 1
      %p236 = por %p234, %p235
      %p237 = scmp.ne.s32.totalorder %s229, %s232
      %p238 = scmp.eq.s32.totalorder %s18, 0
      %p239 = por %p237, %p238
      %p240 = scmp.ne.s32.totalorder %s229, %s232
      %p241 = scmp.eq.s32.totalorder %s23, 1
      %p242 = por %p240, %p241
      %p243 = scmp.ne.s32.totalorder %s232, %s233
      %p244 = scmp.eq.s32.totalorder %s23, 0
      %p245 = por %p243, %p244
      %p246 = scmp.ne.s32.totalorder %s232, %s233
      %p247 = scmp.eq.s32.totalorder %s24, 1
      %p248 = por %p246, %p247
      %p250 = scmp.ne.s32.totalorder %s233, %s249
      %p251 = scmp.eq.s32.totalorder %s24, 0
      %p252 = por %p250, %p251
      %p253 = scmp.le.s32.totalorder 1, %s18
      %p254 = scmp.lt.s32.totalorder %s18, 3
      %p255 = pnand %p253, %p254
      %p256 = pneg %p255
      // Predicated region
      $region9: #{s4_model_forward.6} parent=5 // pred_check
        _
      $region10: #{s4_model_forward.6} parent=5 // pred_check_branch
        %258 = sbr.rel (%p255) target = $region12
      $region11: #{s4_model_forward.6} parent=5 // pred_region
        %s259 = ssub.s32 %s18, 1
        // Predicated region
        $region13: #{s4_model_forward.6} parent=11 // pred_check
          %p260 = pneg %p107
        $region14: #{s4_model_forward.6} parent=11 // pred_check_branch
          %262 = sbr.rel (%p260) target = $region16
        $region15: #{s4_model_forward.6} parent=11 // pred_region
          _
        $region16: #{s4_model_forward.6} parent=11 // pred_fallthru
          _
        // Predicated region
        $region17: #{s4_model_forward.6} parent=11 // pred_check
          %p263 = pneg %p128
        $region18: #{s4_model_forward.6} parent=11 // pred_check_branch
          %265 = sbr.rel (%p263) target = $region20
        $region19: #{s4_model_forward.6} parent=11 // pred_region
          _
        $region20: #{s4_model_forward.6} parent=11 // pred_fallthru
          _
        // Predicated region
        $region21: #{s4_model_forward.6} parent=11 // pred_check
          %p266 = pneg %p149
        $region22: #{s4_model_forward.6} parent=11 // pred_check_branch
          %268 = sbr.rel (%p266) target = $region24
        $region23: #{s4_model_forward.6} parent=11 // pred_region
          _
        $region24: #{s4_model_forward.6} parent=11 // pred_fallthru
          _
        // Predicated region
        $region25: #{s4_model_forward.6} parent=11 // pred_check
          %p269 = pneg %p170
        $region26: #{s4_model_forward.6} parent=11 // pred_check_branch
          %271 = sbr.rel (%p269) target = $region28
        $region27: #{s4_model_forward.6} parent=11 // pred_region
          _
        $region28: #{s4_model_forward.6} parent=11 // pred_fallthru
          _
        // Predicated region
        $region29: #{s4_model_forward.6} parent=11 // pred_check
          %p272 = pneg %p191
        $region30: #{s4_model_forward.6} parent=11 // pred_check_branch
          %274 = sbr.rel (%p272) target = $region32
        $region31: #{s4_model_forward.6} parent=11 // pred_region
          _
        $region32: #{s4_model_forward.6} parent=11 // pred_fallthru
          _
      $region12: #{s4_model_forward.6} parent=5 // pred_fallthru
        _
      %p275 = scmp.lt.s32.totalorder %s18, 2
      // Predicated region
      $region33: #{s4_model_forward.6} parent=5 // pred_check
        %p276 = pneg %p275
      $region34: #{s4_model_forward.6} parent=5 // pred_check_branch
        %278 = sbr.rel (%p276) target = $region36
      $region35: #{s4_model_forward.6} parent=5 // pred_region
        // Predicated region
        $region37: #{s4_model_forward.6} parent=35 // pred_check
          %p279 = pneg %p52
        $region38: #{s4_model_forward.6} parent=35 // pred_check_branch
          %281 = sbr.rel (%p279) target = $region40
        $region39: #{s4_model_forward.6} parent=35 // pred_region
          %s282 = smul.u32 2, %s26
          %p283 = scmp.lt.s32.totalorder %s25, 1
          %s284 = scalar_select %p283, %s25, 1
          %p285 = scmp.lt.s32.totalorder %s282, 1
          %s286 = scalar_select %p285, %s282, 1
          %s287 = smul.addr %s284, 2
          %s288 = sadd.s32 %s286, %s287
          %s289 = smul.addr %s288, 8
          %s290 = scalar_lea.vmem %s0, %s289
          %s291 = smul.u32 2, %s26
        $region40: #{s4_model_forward.6} parent=35 // pred_fallthru
          _
        // Predicated region
        $region41: #{s4_model_forward.6} parent=35 // pred_check
          %p292 = pneg %p80
        $region42: #{s4_model_forward.6} parent=35 // pred_check_branch
          %294 = sbr.rel (%p292) target = $region44
        $region43: #{s4_model_forward.6} parent=35 // pred_region
          %s295 = smul.u32 2, %s26
          %p296 = scmp.lt.s32.totalorder %s25, 1
          %s297 = scalar_select %p296, %s25, 1
          %p298 = scmp.lt.s32.totalorder %s295, 1
          %s299 = scalar_select %p298, %s295, 1
          %s300 = smul.addr %s297, 2
          %s301 = sadd.s32 %s299, %s300
          %s302 = smul.addr %s301, 8
          %s303 = scalar_lea.vmem %s1, %s302
          %s304 = smul.u32 2, %s26
        $region44: #{s4_model_forward.6} parent=35 // pred_fallthru
          _
      $region36: #{s4_model_forward.6} parent=5 // pred_fallthru
        _
      %p305 = scmp.le.s32.totalorder 1, %s18
      %p306 = scmp.lt.s32.totalorder %s18, 3
      %p307 = pnand %p305, %p306
      %p308 = pneg %p307
      // Predicated region
      $region45: #{s4_model_forward.6} parent=5 // pred_check
        _
      $region46: #{s4_model_forward.6} parent=5 // pred_check_branch
        %310 = sbr.rel (%p307) target = $region48
      $region47: #{s4_model_forward.6} parent=5 // pred_region
        %s311 = ssub.s32 %s18, 1
        %s312 = smul.u32 2, %s28
        %p313 = scmp.lt.s32.totalorder %s27, 1
        %s314 = scalar_select %p313, %s27, 1
        %p315 = scmp.lt.s32.totalorder %s312, 1
        %s316 = scalar_select %p315, %s312, 1
        %s317 = smul.addr %s314, 2
        %s318 = sadd.s32 %s316, %s317
        %s319 = smul.addr %s318, 8
        %s320 = scalar_lea.vmem %s0, %s319
        %p321 = pneg %p58
        %p322 = pneg %p55
        %s323 = smul.u32 2, %s28
        %p324 = scmp.lt.s32.totalorder %s27, 1
        %s325 = scalar_select %p324, %s27, 1
        %p326 = scmp.lt.s32.totalorder %s323, 1
        %s327 = scalar_select %p326, %s323, 1
        %s328 = smul.addr %s325, 2
        %s329 = sadd.s32 %s327, %s328
        %s330 = smul.addr %s329, 8
        %s331 = scalar_lea.vmem %s1, %s330
        %p332 = pneg %p86
        %p333 = pneg %p83
        %p334 = pneg %p107
        %p335 = pneg %p104
        %p336 = pneg %p128
        %p337 = pneg %p125
        %p338 = pneg %p149
        %p339 = pneg %p146
        %p340 = pneg %p170
        %p341 = pneg %p167
        %p342 = pneg %p191
        %p343 = pneg %p188
        %p344 = pneg %p219
        %p345 = pneg %p216
        %s346 = sand.u32 %s206, 1
        %s347 = scalar_lea.sflag [#allocation3], %s346
        %s348 = sand.u32 %s206, 1
        %s349 = smul.addr %s348, 16
        %s350 = scalar_lea.vmem [#allocation2], %s349
        %p351 = pneg %p245
        %p352 = pneg %p242
        %p353 = scmp.lt.s32.totalorder %s27, 1
        %s354 = scalar_select %p353, %s27, 1
        %s355 = scalar_lea.vmem %s8, %s354
        %s356 = smul.u32 2, %s28
        %p357 = scmp.lt.s32.totalorder %s27, 1
        %s358 = scalar_select %p357, %s27, 1
        %p359 = scmp.lt.s32.totalorder %s356, 1
        %s360 = scalar_select %p359, %s356, 1
        %s361 = smul.addr %s358, 2
        %s362 = sadd.s32 %s360, %s361
        %s363 = smul.addr %s362, 8
        %s364 = scalar_lea.vmem %s0, %s363
        %s365 = smul.u32 2, %s28
        %s366 = smul.u32 2, %s28
        %p367 = scmp.lt.s32.totalorder %s27, 1
        %s368 = scalar_select %p367, %s27, 1
        %p369 = scmp.lt.s32.totalorder %s366, 1
        %s370 = scalar_select %p369, %s366, 1
        %s371 = smul.addr %s368, 2
        %s372 = sadd.s32 %s370, %s371
        %s373 = smul.addr %s372, 8
        %s374 = scalar_lea.vmem %s1, %s373
        %s375 = smul.u32 2, %s28
        %s376 = smul.u32 2, %s28
        %p377 = scmp.lt.s32.totalorder %s27, 1
        %s378 = scalar_select %p377, %s27, 1
        %s379 = scalar_lea.vmem %s8, %s378
        %v381 = vld [vmem:[%s364] sm:$0xff]
        %v382 = vld [vmem:[%s364 + $0x8] sm:$0xff]
        %v383 = vld [vmem:[%s374] sm:$0xff]
        %v384 = vld [vmem:[%s374 + $0x8] sm:$0xff]
        %v385 = vld [vmem:[%s2] sm:$0x1]
        %v387 = vlaneseq
        %v388 = vshrl.u32 %v387, 7
        %v389 = vsub.s32 0, %v388
        %v390 = vrot.slane %v385, %v389
        %v392 = vmul.f32 %v381, %v390
        %v393 = vmul.f32 %v382, %v390
        %v394 = vadd.f32 %v383, %v392
        %v395 = vadd.f32 %v384, %v393
        %v396 = vmul.f32 %v394, %v394
        %v397 = vmul.f32 %v395, %v395
        %v398 = vmul.f32 %v394, %v396
        %v399 = vmul.f32 %v395, %v397
        %v400 = vmul.f32 %v398, 0.044715
        %v401 = vmul.f32 %v399, 0.044715
        %v402 = vadd.f32 %v394, %v400
        %v403 = vadd.f32 %v395, %v401
        %v404 = vmul.f32 %v402, 0.7978846
        %v405 = vmul.f32 %v403, 0.7978846
        %v406 = vtanh.pop %v404
        %v407 = vtanh.pop %v405
        %v408 = vadd.f32 %v406, 1.0
        %v409 = vadd.f32 %v407, 1.0
        %v410 = vmul.f32 %v408, 0.5
        %v411 = vmul.f32 %v409, 0.5
        %v412 = vmul.f32 %v394, %v410
        %v413 = vmul.f32 %v395, %v411
        %v414 = vpack.c.bf16 %v413, %v412
        %v415 = vld [vmem:[%s3] sm:$0xff]
        %v416 = vld [vmem:[%s3 + $0x8] sm:$0xff]
        %v417 = vld [vmem:[%s3 + $0x10] sm:$0xff]
        %v418 = vld [vmem:[%s3 + $0x18] sm:$0xff]
        %v419 = vld [vmem:[%s3 + $0x20] sm:$0xff]
        %v420 = vld [vmem:[%s3 + $0x28] sm:$0xff]
        %v421 = vld [vmem:[%s3 + $0x30] sm:$0xff]
        %v422 = vld [vmem:[%s3 + $0x38] sm:$0xff]
        %v423 = vld [vmem:[%s3 + $0x40] sm:$0xff]
        %v424 = vld [vmem:[%s3 + $0x48] sm:$0xff]
        %v425 = vld [vmem:[%s3 + $0x50] sm:$0xff]
        %v426 = vld [vmem:[%s3 + $0x58] sm:$0xff]
        %v427 = vld [vmem:[%s3 + $0x60] sm:$0xff]
        %v428 = vld [vmem:[%s3 + $0x68] sm:$0xff]
        %v429 = vld [vmem:[%s3 + $0x70] sm:$0xff]
        %v430 = vld [vmem:[%s3 + $0x78] sm:$0xff]
        %v431 = vld [vmem:[%s4] sm:$0x3]
        %v433 = vlaneseq
        %v434 = vshrl.u32 %v433, 7
        %v435 = vsub.s32 0, %v434
        %v436 = vrot.slane %v431, %v435
        %v437 = vlaneseq
        %v438 = vshrl.u32 %v437, 7
        %v439 = vsub.s32 1, %v438
        %v440 = vrot.slane %v431, %v439
        %v459 = vunpack.c.l.b16 %v415
        %v460 = vunpack.c.h.b16 %v415
        %v461 = vunpack.c.l.b16 %v416
        %v462 = vunpack.c.h.b16 %v416
        %v463 = vunpack.c.l.b16 %v417
        %v464 = vunpack.c.h.b16 %v417
        %v465 = vunpack.c.l.b16 %v418
        %v466 = vunpack.c.h.b16 %v418
        %v467 = vunpack.c.l.b16 %v419
        %v468 = vunpack.c.h.b16 %v419
        %v469 = vunpack.c.l.b16 %v420
        %v470 = vunpack.c.h.b16 %v420
        %v471 = vunpack.c.l.b16 %v421
        %v472 = vunpack.c.h.b16 %v421
        %v473 = vunpack.c.l.b16 %v422
        %v474 = vunpack.c.h.b16 %v422
        %v475 = vunpack.c.l.b16 %v423
        %v476 = vunpack.c.h.b16 %v423
        %v477 = vunpack.c.l.b16 %v424
        %v478 = vunpack.c.h.b16 %v424
        %v479 = vunpack.c.l.b16 %v425
        %v480 = vunpack.c.h.b16 %v425
        %v481 = vunpack.c.l.b16 %v426
        %v482 = vunpack.c.h.b16 %v426
        %v483 = vunpack.c.l.b16 %v427
        %v484 = vunpack.c.h.b16 %v427
        %v485 = vunpack.c.l.b16 %v428
        %v486 = vunpack.c.h.b16 %v428
        %v487 = vunpack.c.l.b16 %v429
        %v488 = vunpack.c.h.b16 %v429
        %v489 = vunpack.c.l.b16 %v430
        %v490 = vunpack.c.h.b16 %v430
        %v491 = vpack.c.b16 %v461, %v459
        %v492 = vpack.c.b16 %v462, %v460
        %v493 = vpack.c.b16 %v465, %v463
        %v494 = vpack.c.b16 %v466, %v464
        %v495 = vpack.c.b16 %v469, %v467
        %v496 = vpack.c.b16 %v470, %v468
        %v497 = vpack.c.b16 %v473, %v471
        %v498 = vpack.c.b16 %v474, %v472
        %v499 = vpack.c.b16 %v477, %v475
        %v500 = vpack.c.b16 %v478, %v476
        %v501 = vpack.c.b16 %v481, %v479
        %v502 = vpack.c.b16 %v482, %v480
        %v503 = vpack.c.b16 %v485, %v483
        %v504 = vpack.c.b16 %v486, %v484
        %v505 = vpack.c.b16 %v489, %v487
        %v506 = vpack.c.b16 %v490, %v488
        %523 = vmatprep.subr.bf16.mxu0 %v492
        %524 = vmatpush1.bf16.msra.mxu0 %v491
        %525 = vmatprep.subr.bf16.mxu0 %v494
        %526 = vmatpush1.bf16.msra.mxu0 %v493
        %527 = vmatprep.subr.bf16.mxu0 %v496
        %528 = vmatpush1.bf16.msra.mxu0 %v495
        %529 = vmatprep.subr.bf16.mxu0 %v498
        %530 = vmatpush1.bf16.msra.mxu0 %v497
        %531 = vmatprep.subr.bf16.mxu0 %v500
        %532 = vmatpush1.bf16.msra.mxu0 %v499
        %533 = vmatprep.subr.bf16.mxu0 %v502
        %534 = vmatpush1.bf16.msra.mxu0 %v501
        %535 = vmatprep.subr.bf16.mxu0 %v504
        %536 = vmatpush1.bf16.msra.mxu0 %v503
        %537 = vmatprep.subr.bf16.mxu0 %v506
        %538 = vmatpush1.bf16.msra.mxu0 %v505
        %539 = vmatprep.subr.bf16.mxu0 0
        %540 = vmatpush1.bf16.msra.mxu0 0
        %541 = vmatprep.subr.bf16.mxu0 0
        %542 = vmatpush1.bf16.msra.mxu0 0
        %543 = vmatprep.subr.bf16.mxu0 0
        %544 = vmatpush1.bf16.msra.mxu0 0
        %545 = vmatprep.subr.bf16.mxu0 0
        %546 = vmatpush1.bf16.msra.mxu0 0
        %547 = vmatprep.subr.bf16.mxu0 0
        %548 = vmatpush1.bf16.msra.mxu0 0
        %549 = vmatprep.subr.bf16.mxu0 0
        %550 = vmatpush1.bf16.msra.mxu0 0
        %551 = vmatprep.subr.bf16.mxu0 0
        %552 = vmatpush1.bf16.msra.mxu0 0
        %553 = vmatprep.subr.bf16.mxu0 0
        %554 = vmatpush1.bf16.msra.mxu0 0
        %555 = vmatprep.mubr.bf16.mxu0 0
        %556 = vmatmul.mubr.bf16.gmra.mrb[0].mxu0 %v414
        %v557 = vpop.f32.mrb[0].mxu0
        %v558 = vadd.f32 %v436, %v557
        %v559 = vpop.f32.mrb[0].mxu0
        %v560 = vadd.f32 %v440, %v559
        %v561 = vpop.f32.mrb[0].mxu0
        %v562 = vadd.f32 %v436, %v561
        %v563 = vpop.f32.mrb[0].mxu0
        %v564 = vadd.f32 %v440, %v563
        %565 = vdwg.mxu0
        %v566 = vxor.u32 %v560, 2147483648
        %v567 = vxor.u32 %v564, 2147483648
        %v568 = vmul.f32 %v566, 1.442695
        %v569 = vpow.pop %v568
        %v570 = vmul.f32 %v567, 1.442695
        %v571 = vpow.pop %v570
        %v572 = vadd.f32 %v569, 1.0
        %v573 = vadd.f32 %v571, 1.0
        %v574 = vrcp.pop %v572
        %v575 = vmul.f32 1.0, %v574
        %v576 = vrcp.pop %v573
        %v577 = vmul.f32 1.0, %v576
        %v578 = vmul.f32 %v558, %v575
        %v579 = vmul.f32 %v562, %v577
        %v580 = vadd.f32 %v578, %v381
        %v581 = vadd.f32 %v579, %v382
        %582 = vadd.xlane.f32.xlu0 %v580
        %v583 = vpop.xlane.xlu0 %582
        %584 = vadd.xlane.f32.xlu0 %v581
        %v585 = vpop.xlane.xlu0 %584
        %v586 = vrcp.pop 128.0
        %v587 = vmul.f32 %v583, %v586
        %v588 = vmul.f32 %v585, %v586
        %v589 = vsub.f32 %v580, %v587
        %v590 = vsub.f32 %v581, %v588
        %v591 = vmul.f32 %v589, %v589
        %v592 = vmul.f32 %v590, %v590
        %593 = vadd.xlane.f32.xlu0 %v591
        %v594 = vpop.xlane.xlu0 %593
        %595 = vadd.xlane.f32.xlu0 %v592
        %v596 = vpop.xlane.xlu0 %595
        %v597 = vmul.f32 %v594, %v586
        %v598 = vmul.f32 %v596, %v586
        %v599 = vadd.f32 %v597, 1e-05
        %v600 = vadd.f32 %v598, 1e-05
        %v601 = vrsqrt.pop %v599
        %v602 = vrsqrt.pop %v600
        %v603 = vmul.f32 %v589, %v601
        %v604 = vmul.f32 %v590, %v602
        %v605 = vld [vmem:[%s5] sm:$0x1]
        %v607 = vlaneseq
        %v608 = vshrl.u32 %v607, 7
        %v609 = vsub.s32 0, %v608
        %v610 = vrot.slane %v605, %v609
        %v612 = vmul.f32 %v603, %v610
        %v613 = vmul.f32 %v604, %v610
        %v614 = vld [vmem:[%s6] sm:$0x1]
        %v616 = vlaneseq
        %v617 = vshrl.u32 %v616, 7
        %v618 = vsub.s32 0, %v617
        %v619 = vrot.slane %v614, %v618
        %v621 = vadd.f32 %v612, %v619
        %v622 = vadd.f32 %v613, %v619
        %623 = vst [vmem:[%s350] sm:$0xff] %v621
        %624 = vst [vmem:[%s350 + $0x8] sm:$0xff] %v622
        %v625 = vadd.f32 %v621, %v622
        %v626 = vrot.slane %v625, 4
        %v627 = vadd.f32 %v625, %v626
        %v628 = vrot.slane %v627, 2
        %v629 = vadd.f32 %v627, %v628
        %v630 = vrot.slane %v629, 1
        %v631 = vadd.f32 %v629, %v630
        %p632 = scmp.eq.s32.totalorder %s28, 0
        // Predicated region
        $region49: #{s4_model_forward.6} parent=47 // pred_check
          %p633 = pneg %p632
        $region50: #{s4_model_forward.6} parent=47 // pred_check_branch
          %635 = sbr.rel (%p633) target = $region52
        $region51: #{s4_model_forward.6} parent=47 // pred_region
          %636 = vst [vmem:[%s379] sm:$0x1] %v631
        $region52: #{s4_model_forward.6} parent=47 // pred_fallthru
          _
        %p637 = scmp.ne.s32.totalorder %s28, 0
        // Predicated region
        $region53: #{s4_model_forward.6} parent=47 // pred_check
          %p638 = pneg %p637
        $region54: #{s4_model_forward.6} parent=47 // pred_check_branch
          %640 = sbr.rel (%p638) target = $region56
        $region55: #{s4_model_forward.6} parent=47 // pred_region
          %v641 = vld [vmem:[%s379] sm:$0x1]
          %v642 = vadd.f32 %v641, %v631
          %643 = vst [vmem:[%s379] sm:$0x1] %v642
        $region56: #{s4_model_forward.6} parent=47 // pred_fallthru
          _
        %s644 = sand.u32 %s206, 1
        %s645 = scalar_lea.sflag [#allocation3], %s644
        %s646 = sand.u32 %s206, 1
        %s647 = smul.addr %s646, 16
        %s648 = scalar_lea.vmem [#allocation2], %s647
        %p649 = scmp.lt.s32.totalorder %s27, 1
        %s650 = scalar_select %p649, %s27, 1
        %s651 = scalar_lea.vmem %s8, %s650
        // Predicated region
        $region57: #{s4_model_forward.6} parent=47 // pred_check
          %p652 = pneg %p216
        $region58: #{s4_model_forward.6} parent=47 // pred_check_branch
          %654 = sbr.rel (%p652) target = $region60
        $region59: #{s4_model_forward.6} parent=47 // pred_region
          %s655 = smul.u32 2, %s28
          %s657 = ssub.s32 256, 256
          %658 = vsyncadd %s645, %s657
          %s659 = smul.addr %s27, 2
          %s660 = sadd.s32 %s655, %s659
          %s661 = smul.addr %s660, 128
          %s662 = scalar_lea.hbm %s7, %s661
          %s663 = sshll.u32 %s648, 4
          %s664 = int_to_ptr.vmem [resolvable:$true] %s663
          %669 = dma.vmem_to_hbm [thread:$0]  %s664, 256, %s662, %s645, 128, 128, 8
        $region60: #{s4_model_forward.6} parent=47 // pred_fallthru
          _
        // Predicated region
        $region61: #{s4_model_forward.6} parent=47 // pred_check
          %p670 = pneg %p242
        $region62: #{s4_model_forward.6} parent=47 // pred_check_branch
          %672 = sbr.rel (%p670) target = $region64
        $region63: #{s4_model_forward.6} parent=47 // pred_region
          _
        $region64: #{s4_model_forward.6} parent=47 // pred_fallthru
          _
      $region48: #{s4_model_forward.6} parent=5 // pred_fallthru
        _
      %p673 = scmp.le.s32.totalorder 2, %s18
      // Predicated region
      $region65: #{s4_model_forward.6} parent=5 // pred_check
        %p674 = pneg %p673
      $region66: #{s4_model_forward.6} parent=5 // pred_check_branch
        %676 = sbr.rel (%p674) target = $region68
      $region67: #{s4_model_forward.6} parent=5 // pred_region
        %s677 = ssub.s32 %s18, 2
        // Predicated region
        $region69: #{s4_model_forward.6} parent=67 // pred_check
          %p678 = pneg %p222
        $region70: #{s4_model_forward.6} parent=67 // pred_check_branch
          %680 = sbr.rel (%p678) target = $region72
        $region71: #{s4_model_forward.6} parent=67 // pred_region
          %s681 = sand.u32 %s207, 1
          %s682 = scalar_lea.sflag [#allocation3], %s681
          %s683 = sand.u32 %s207, 1
          %s684 = smul.addr %s683, 16
          %s685 = scalar_lea.vmem [#allocation2], %s684
          %686 = dma.done %s682, 256
        $region72: #{s4_model_forward.6} parent=67 // pred_fallthru
          _
        // Predicated region
        $region73: #{s4_model_forward.6} parent=67 // pred_check
          %p687 = pneg %p248
        $region74: #{s4_model_forward.6} parent=67 // pred_check_branch
          %689 = sbr.rel (%p687) target = $region76
        $region75: #{s4_model_forward.6} parent=67 // pred_region
          %p690 = scmp.lt.s32.totalorder %s29, 1
          %s691 = scalar_select %p690, %s29, 1
          %s692 = scalar_lea.vmem %s8, %s691
        $region76: #{s4_model_forward.6} parent=67 // pred_fallthru
          _
      $region68: #{s4_model_forward.6} parent=5 // pred_fallthru
        _
    $region6: #{s4_model_forward.6} parent=1 // loop_footer
      %s22 = sadd.s32 1, %s18
    $region7: #{s4_model_forward.6} parent=1 // loop_footer_branch
      %17 = sbr.rel target = $region3
    $region8: #{s4_model_forward.6} parent=1 // loop_exit
      _
    %693 = vsyncpa [#allocation3], 1
    %s694 = scalar_lea.sflag [#allocation3], 1
    %695 = vsyncpa %s694, 1

// kernel: s4_model_forward.5
$region0: #{s4_model_forward.5}
  #allocation0 [shape = 'u32[]', space=smem, size = 0x4, offset = 0x4, fixed_abs, tag = 'smem constant byte address 0x4 - core index']
  #allocation1 [shape = 'u32[144,128]{1,0:T(1,128)}', space=vmem, size = 0x12000, scoped, tag = 'internal scratch']
  %s0 = inlined_call_operand.vmem [shape: f32[2,16,128], index: 0, kind: input, shape index: {}]
  %s1 = inlined_call_operand.vmem [shape: f32[2,16,128], index: 1, kind: input, shape index: {}]
  %s2 = inlined_call_operand.vmem [shape: f32[1,128], index: 2, kind: input, shape index: {}]
  %s3 = inlined_call_operand.vmem [shape: bf16[128,256], index: 3, kind: input, shape index: {}]
  %s4 = inlined_call_operand.vmem [shape: f32[1,256], index: 4, kind: input, shape index: {}]
  %s5 = inlined_call_operand.vmem [shape: f32[1,128], index: 5, kind: input, shape index: {}]
  %s6 = inlined_call_operand.vmem [shape: f32[1,128], index: 6, kind: input, shape index: {}]
  %s7 = inlined_call_operand.vmem [shape: f32[2,16,128], index: 7, kind: output, shape index: {0}]
  %s8 = inlined_call_operand.hbm [shape: f32[2,1,128], index: 8, kind: output, shape index: {1}]
  %9 = xla_tuple %s7, %s8
  %s10 = sld [smem:[#allocation0]]
  $region77: #{s4_model_forward.5} parent=0
    _
  %s12 = ssub.s32 1, %s10
  %s13 = scalar_select 0, %s12, %s10
  $region1: #{s4_model_forward.5} parent=0
    #allocation2 [shape = 'u8[1024]{0}', space=vmem, size = 0x400, scoped, tag = 'output window, operand 1']
    #allocation3 [shape = 's32[2]{0}', space=sflag, size = 0x8, scoped, tag = 'scoped memory for s4_model_forward.5']
    %14 = vsyncpa [#allocation3], 0
    %s15 = scalar_lea.sflag [#allocation3], 1
    %16 = vsyncpa %s15, 0
    loop: start=0, step=1, limit=4
    $region2: #{s4_model_forward.5} parent=1 // loop_pre_header
      _
    $region3: #{s4_model_forward.5} parent=1 // loop_header
      %s18 = sphi 0, %s22
      %p19 = scmp.ge.s32.totalorder %s18, 4
      %s25 = sphi 0, %s37
      %s26 = sphi 0, %s33
      %s27 = sphi 0, %s25
      %s28 = sphi 0, %s26
      %s29 = sphi 0, %s27
      %s30 = sphi 0, %s28
      %s42 = sphi 0, %s44
      %s45 = sphi 0, %s42
      %s46 = sphi 0, %s45
      %s62 = sphi 0, %s46
      %s70 = sphi 0, %s72
      %s73 = sphi 0, %s70
      %s74 = sphi 0, %s73
      %s90 = sphi 0, %s74
      %s94 = sphi 0, %s94
      %s96 = sphi 0, %s94
      %s97 = sphi 0, %s96
      %s111 = sphi 0, %s97
      %s115 = sphi 0, %s115
      %s117 = sphi 0, %s115
      %s118 = sphi 0, %s117
      %s132 = sphi 0, %s118
      %s136 = sphi 0, %s136
      %s138 = sphi 0, %s136
      %s139 = sphi 0, %s138
      %s153 = sphi 0, %s139
      %s157 = sphi 0, %s157
      %s159 = sphi 0, %s157
      %s160 = sphi 0, %s159
      %s174 = sphi 0, %s160
      %s178 = sphi 0, %s178
      %s180 = sphi 0, %s178
      %s181 = sphi 0, %s180
      %s195 = sphi 0, %s181
      %s203 = sphi 0, %s205
      %s206 = sphi 0, %s203
      %s207 = sphi 0, %s206
      %s223 = sphi 0, %s207
      %s229 = sphi 0, %s231
      %s232 = sphi 0, %s229
      %s233 = sphi 0, %s232
      %s249 = sphi 0, %s233
    $region4: #{s4_model_forward.5} parent=1 // loop_header_branch
      %21 = sbr.rel (%p19) target = $region8
    $region5: #{s4_model_forward.5} parent=1 // loop_body
      %s23 = ssub.s32 %s18, 1
      %s24 = ssub.s32 %s18, 2
      %s31 = sadd.s32 1, %s26
      %p32 = scmp.ge.s32.totalorder %s31, 1
      %s33 = scalar_select %p32, 0, %s31
      %s34 = sadd.s32 1, %s25
      %s35 = scalar_select %p32, %s34, %s25
      %p36 = scmp.ge.s32.totalorder %s35, 2
      %s37 = scalar_select %p36, 0, %s35
      %s38 = ssub.s32 %s25, %s37
      %s39 = ssub.s32 %s26, %s33
      %s40 = sor.u32 %s38, %s39
      %p41 = scmp.eq.s32.totalorder %s40, 0
      %s43 = sadd.s32 %s42, 1
      %s44 = scalar_select %p41, %s42, %s43
      %p47 = pneg %p41
      %p48 = scmp.eq.s32.totalorder %s18, 1
      %p49 = por %p47, %p48
      %p50 = scmp.ne.s32.totalorder %s42, %s45
      %p51 = scmp.eq.s32.totalorder %s18, 0
      %p52 = por %p50, %p51
      %p53 = scmp.ne.s32.totalorder %s42, %s45
      %p54 = scmp.eq.s32.totalorder %s23, 1
      %p55 = por %p53, %p54
      %p56 = scmp.ne.s32.totalorder %s45, %s46
      %p57 = scmp.eq.s32.totalorder %s23, 0
      %p58 = por %p56, %p57
      %p59 = scmp.ne.s32.totalorder %s45, %s46
      %p60 = scmp.eq.s32.totalorder %s24, 1
      %p61 = por %p59, %p60
      %p63 = scmp.ne.s32.totalorder %s46, %s62
      %p64 = scmp.eq.s32.totalorder %s24, 0
      %p65 = por %p63, %p64
      %s66 = ssub.s32 %s25, %s37
      %s67 = ssub.s32 %s26, %s33
      %s68 = sor.u32 %s66, %s67
      %p69 = scmp.eq.s32.totalorder %s68, 0
      %s71 = sadd.s32 %s70, 1
      %s72 = scalar_select %p69, %s70, %s71
      %p75 = pneg %p69
      %p76 = scmp.eq.s32.totalorder %s18, 1
      %p77 = por %p75, %p76
      %p78 = scmp.ne.s32.totalorder %s70, %s73
      %p79 = scmp.eq.s32.totalorder %s18, 0
      %p80 = por %p78, %p79
      %p81 = scmp.ne.s32.totalorder %s70, %s73
      %p82 = scmp.eq.s32.totalorder %s23, 1
      %p83 = por %p81, %p82
      %p84 = scmp.ne.s32.totalorder %s73, %s74
      %p85 = scmp.eq.s32.totalorder %s23, 0
      %p86 = por %p84, %p85
      %p87 = scmp.ne.s32.totalorder %s73, %s74
      %p88 = scmp.eq.s32.totalorder %s24, 1
      %p89 = por %p87, %p88
      %p91 = scmp.ne.s32.totalorder %s74, %s90
      %p92 = scmp.eq.s32.totalorder %s24, 0
      %p93 = por %p91, %p92
      %s95 = sadd.s32 %s94, 1
      %p98 = scmp.eq.s32.totalorder %s18, 1
      %p99 = scmp.ne.s32.totalorder %s94, %s96
      %p100 = scmp.eq.s32.totalorder %s18, 0
      %p101 = por %p99, %p100
      %p102 = scmp.ne.s32.totalorder %s94, %s96
      %p103 = scmp.eq.s32.totalorder %s23, 1
      %p104 = por %p102, %p103
      %p105 = scmp.ne.s32.totalorder %s96, %s97
      %p106 = scmp.eq.s32.totalorder %s23, 0
      %p107 = por %p105, %p106
      %p108 = scmp.ne.s32.totalorder %s96, %s97
      %p109 = scmp.eq.s32.totalorder %s24, 1
      %p110 = por %p108, %p109
      %p112 = scmp.ne.s32.totalorder %s97, %s111
      %p113 = scmp.eq.s32.totalorder %s24, 0
      %p114 = por %p112, %p113
      %s116 = sadd.s32 %s115, 1
      %p119 = scmp.eq.s32.totalorder %s18, 1
      %p120 = scmp.ne.s32.totalorder %s115, %s117
      %p121 = scmp.eq.s32.totalorder %s18, 0
      %p122 = por %p120, %p121
      %p123 = scmp.ne.s32.totalorder %s115, %s117
      %p124 = scmp.eq.s32.totalorder %s23, 1
      %p125 = por %p123, %p124
      %p126 = scmp.ne.s32.totalorder %s117, %s118
      %p127 = scmp.eq.s32.totalorder %s23, 0
      %p128 = por %p126, %p127
      %p129 = scmp.ne.s32.totalorder %s117, %s118
      %p130 = scmp.eq.s32.totalorder %s24, 1
      %p131 = por %p129, %p130
      %p133 = scmp.ne.s32.totalorder %s118, %s132
      %p134 = scmp.eq.s32.totalorder %s24, 0
      %p135 = por %p133, %p134
      %s137 = sadd.s32 %s136, 1
      %p140 = scmp.eq.s32.totalorder %s18, 1
      %p141 = scmp.ne.s32.totalorder %s136, %s138
      %p142 = scmp.eq.s32.totalorder %s18, 0
      %p143 = por %p141, %p142
      %p144 = scmp.ne.s32.totalorder %s136, %s138
      %p145 = scmp.eq.s32.totalorder %s23, 1
      %p146 = por %p144, %p145
      %p147 = scmp.ne.s32.totalorder %s138, %s139
      %p148 = scmp.eq.s32.totalorder %s23, 0
      %p149 = por %p147, %p148
      %p150 = scmp.ne.s32.totalorder %s138, %s139
      %p151 = scmp.eq.s32.totalorder %s24, 1
      %p152 = por %p150, %p151
      %p154 = scmp.ne.s32.totalorder %s139, %s153
      %p155 = scmp.eq.s32.totalorder %s24, 0
      %p156 = por %p154, %p155
      %s158 = sadd.s32 %s157, 1
      %p161 = scmp.eq.s32.totalorder %s18, 1
      %p162 = scmp.ne.s32.totalorder %s157, %s159
      %p163 = scmp.eq.s32.totalorder %s18, 0
      %p164 = por %p162, %p163
      %p165 = scmp.ne.s32.totalorder %s157, %s159
      %p166 = scmp.eq.s32.totalorder %s23, 1
      %p167 = por %p165, %p166
      %p168 = scmp.ne.s32.totalorder %s159, %s160
      %p169 = scmp.eq.s32.totalorder %s23, 0
      %p170 = por %p168, %p169
      %p171 = scmp.ne.s32.totalorder %s159, %s160
      %p172 = scmp.eq.s32.totalorder %s24, 1
      %p173 = por %p171, %p172
      %p175 = scmp.ne.s32.totalorder %s160, %s174
      %p176 = scmp.eq.s32.totalorder %s24, 0
      %p177 = por %p175, %p176
      %s179 = sadd.s32 %s178, 1
      %p182 = scmp.eq.s32.totalorder %s18, 1
      %p183 = scmp.ne.s32.totalorder %s178, %s180
      %p184 = scmp.eq.s32.totalorder %s18, 0
      %p185 = por %p183, %p184
      %p186 = scmp.ne.s32.totalorder %s178, %s180
      %p187 = scmp.eq.s32.totalorder %s23, 1
      %p188 = por %p186, %p187
      %p189 = scmp.ne.s32.totalorder %s180, %s181
      %p190 = scmp.eq.s32.totalorder %s23, 0
      %p191 = por %p189, %p190
      %p192 = scmp.ne.s32.totalorder %s180, %s181
      %p193 = scmp.eq.s32.totalorder %s24, 1
      %p194 = por %p192, %p193
      %p196 = scmp.ne.s32.totalorder %s181, %s195
      %p197 = scmp.eq.s32.totalorder %s24, 0
      %p198 = por %p196, %p197
      %s199 = ssub.s32 %s25, %s37
      %s200 = ssub.s32 %s26, %s33
      %s201 = sor.u32 %s199, %s200
      %p202 = scmp.eq.s32.totalorder %s201, 0
      %s204 = sadd.s32 %s203, 1
      %s205 = scalar_select %p202, %s203, %s204
      %p208 = pneg %p202
      %p209 = scmp.eq.s32.totalorder %s18, 1
      %p210 = por %p208, %p209
      %p211 = scmp.ne.s32.totalorder %s203, %s206
      %p212 = scmp.eq.s32.totalorder %s18, 0
      %p213 = por %p211, %p212
      %p214 = scmp.ne.s32.totalorder %s203, %s206
      %p215 = scmp.eq.s32.totalorder %s23, 1
      %p216 = por %p214, %p215
      %p217 = scmp.ne.s32.totalorder %s206, %s207
      %p218 = scmp.eq.s32.totalorder %s23, 0
      %p219 = por %p217, %p218
      %p220 = scmp.ne.s32.totalorder %s206, %s207
      %p221 = scmp.eq.s32.totalorder %s24, 1
      %p222 = por %p220, %p221
      %p224 = scmp.ne.s32.totalorder %s207, %s223
      %p225 = scmp.eq.s32.totalorder %s24, 0
      %p226 = por %p224, %p225
      %s227 = ssub.s32 %s25, %s37
      %p228 = scmp.eq.s32.totalorder %s227, 0
      %s230 = sadd.s32 %s229, 1
      %s231 = scalar_select %p228, %s229, %s230
      %p234 = pneg %p228
      %p235 = scmp.eq.s32.totalorder %s18, 1
      %p236 = por %p234, %p235
      %p237 = scmp.ne.s32.totalorder %s229, %s232
      %p238 = scmp.eq.s32.totalorder %s18, 0
      %p239 = por %p237, %p238
      %p240 = scmp.ne.s32.totalorder %s229, %s232
      %p241 = scmp.eq.s32.totalorder %s23, 1
      %p242 = por %p240, %p241
      %p243 = scmp.ne.s32.totalorder %s232, %s233
      %p244 = scmp.eq.s32.totalorder %s23, 0
      %p245 = por %p243, %p244
      %p246 = scmp.ne.s32.totalorder %s232, %s233
      %p247 = scmp.eq.s32.totalorder %s24, 1
      %p248 = por %p246, %p247
      %p250 = scmp.ne.s32.totalorder %s233, %s249
      %p251 = scmp.eq.s32.totalorder %s24, 0
      %p252 = por %p250, %p251
      %p253 = scmp.le.s32.totalorder 1, %s18
      %p254 = scmp.lt.s32.totalorder %s18, 3
      %p255 = pnand %p253, %p254
      %p256 = pneg %p255
      // Predicated region
      $region9: #{s4_model_forward.5} parent=5 // pred_check
        _
      $region10: #{s4_model_forward.5} parent=5 // pred_check_branch
        %258 = sbr.rel (%p255) target = $region12
      $region11: #{s4_model_forward.5} parent=5 // pred_region
        %s259 = ssub.s32 %s18, 1
        // Predicated region
        $region13: #{s4_model_forward.5} parent=11 // pred_check
          %p260 = pneg %p107
        $region14: #{s4_model_forward.5} parent=11 // pred_check_branch
          %262 = sbr.rel (%p260) target = $region16
        $region15: #{s4_model_forward.5} parent=11 // pred_region
          _
        $region16: #{s4_model_forward.5} parent=11 // pred_fallthru
          _
        // Predicated region
        $region17: #{s4_model_forward.5} parent=11 // pred_check
          %p263 = pneg %p128
        $region18: #{s4_model_forward.5} parent=11 // pred_check_branch
          %265 = sbr.rel (%p263) target = $region20
        $region19: #{s4_model_forward.5} parent=11 // pred_region
          _
        $region20: #{s4_model_forward.5} parent=11 // pred_fallthru
          _
        // Predicated region
        $region21: #{s4_model_forward.5} parent=11 // pred_check
          %p266 = pneg %p149
        $region22: #{s4_model_forward.5} parent=11 // pred_check_branch
          %268 = sbr.rel (%p266) target = $region24
        $region23: #{s4_model_forward.5} parent=11 // pred_region
          _
        $region24: #{s4_model_forward.5} parent=11 // pred_fallthru
          _
        // Predicated region
        $region25: #{s4_model_forward.5} parent=11 // pred_check
          %p269 = pneg %p170
        $region26: #{s4_model_forward.5} parent=11 // pred_check_branch
          %271 = sbr.rel (%p269) target = $region28
        $region27: #{s4_model_forward.5} parent=11 // pred_region
          _
        $region28: #{s4_model_forward.5} parent=11 // pred_fallthru
          _
        // Predicated region
        $region29: #{s4_model_forward.5} parent=11 // pred_check
          %p272 = pneg %p191
        $region30: #{s4_model_forward.5} parent=11 // pred_check_branch
          %274 = sbr.rel (%p272) target = $region32
        $region31: #{s4_model_forward.5} parent=11 // pred_region
          _
        $region32: #{s4_model_forward.5} parent=11 // pred_fallthru
          _
      $region12: #{s4_model_forward.5} parent=5 // pred_fallthru
        _
      %p275 = scmp.lt.s32.totalorder %s18, 2
      // Predicated region
      $region33: #{s4_model_forward.5} parent=5 // pred_check
        %p276 = pneg %p275
      $region34: #{s4_model_forward.5} parent=5 // pred_check_branch
        %278 = sbr.rel (%p276) target = $region36
      $region35: #{s4_model_forward.5} parent=5 // pred_region
        // Predicated region
        $region37: #{s4_model_forward.5} parent=35 // pred_check
          %p279 = pneg %p52
        $region38: #{s4_model_forward.5} parent=35 // pred_check_branch
          %281 = sbr.rel (%p279) target = $region40
        $region39: #{s4_model_forward.5} parent=35 // pred_region
          %s282 = smul.u32 2, %s26
          %p283 = scmp.lt.s32.totalorder %s25, 1
          %s284 = scalar_select %p283, %s25, 1
          %p285 = scmp.lt.s32.totalorder %s282, 1
          %s286 = scalar_select %p285, %s282, 1
          %s287 = smul.addr %s284, 2
          %s288 = sadd.s32 %s286, %s287
          %s289 = smul.addr %s288, 8
          %s290 = scalar_lea.vmem %s0, %s289
          %s291 = smul.u32 2, %s26
        $region40: #{s4_model_forward.5} parent=35 // pred_fallthru
          _
        // Predicated region
        $region41: #{s4_model_forward.5} parent=35 // pred_check
          %p292 = pneg %p80
        $region42: #{s4_model_forward.5} parent=35 // pred_check_branch
          %294 = sbr.rel (%p292) target = $region44
        $region43: #{s4_model_forward.5} parent=35 // pred_region
          %s295 = smul.u32 2, %s26
          %p296 = scmp.lt.s32.totalorder %s25, 1
          %s297 = scalar_select %p296, %s25, 1
          %p298 = scmp.lt.s32.totalorder %s295, 1
          %s299 = scalar_select %p298, %s295, 1
          %s300 = smul.addr %s297, 2
          %s301 = sadd.s32 %s299, %s300
          %s302 = smul.addr %s301, 8
          %s303 = scalar_lea.vmem %s1, %s302
          %s304 = smul.u32 2, %s26
        $region44: #{s4_model_forward.5} parent=35 // pred_fallthru
          _
      $region36: #{s4_model_forward.5} parent=5 // pred_fallthru
        _
      %p305 = scmp.le.s32.totalorder 1, %s18
      %p306 = scmp.lt.s32.totalorder %s18, 3
      %p307 = pnand %p305, %p306
      %p308 = pneg %p307
      // Predicated region
      $region45: #{s4_model_forward.5} parent=5 // pred_check
        _
      $region46: #{s4_model_forward.5} parent=5 // pred_check_branch
        %310 = sbr.rel (%p307) target = $region48
      $region47: #{s4_model_forward.5} parent=5 // pred_region
        %s311 = ssub.s32 %s18, 1
        %s312 = smul.u32 2, %s28
        %p313 = scmp.lt.s32.totalorder %s27, 1
        %s314 = scalar_select %p313, %s27, 1
        %p315 = scmp.lt.s32.totalorder %s312, 1
        %s316 = scalar_select %p315, %s312, 1
        %s317 = smul.addr %s314, 2
        %s318 = sadd.s32 %s316, %s317
        %s319 = smul.addr %s318, 8
        %s320 = scalar_lea.vmem %s0, %s319
        %p321 = pneg %p58
        %p322 = pneg %p55
        %s323 = smul.u32 2, %s28
        %p324 = scmp.lt.s32.totalorder %s27, 1
        %s325 = scalar_select %p324, %s27, 1
        %p326 = scmp.lt.s32.totalorder %s323, 1
        %s327 = scalar_select %p326, %s323, 1
        %s328 = smul.addr %s325, 2
        %s329 = sadd.s32 %s327, %s328
        %s330 = smul.addr %s329, 8
        %s331 = scalar_lea.vmem %s1, %s330
        %p332 = pneg %p86
        %p333 = pneg %p83
        %p334 = pneg %p107
        %p335 = pneg %p104
        %p336 = pneg %p128
        %p337 = pneg %p125
        %p338 = pneg %p149
        %p339 = pneg %p146
        %p340 = pneg %p170
        %p341 = pneg %p167
        %p342 = pneg %p191
        %p343 = pneg %p188
        %p344 = pneg %p219
        %p345 = pneg %p216
        %s346 = smul.u32 2, %s28
        %p347 = scmp.lt.s32.totalorder %s27, 1
        %s348 = scalar_select %p347, %s27, 1
        %p349 = scmp.lt.s32.totalorder %s346, 1
        %s350 = scalar_select %p349, %s346, 1
        %s351 = smul.addr %s348, 2
        %s352 = sadd.s32 %s350, %s351
        %s353 = smul.addr %s352, 8
        %s354 = scalar_lea.vmem %s7, %s353
        %p355 = pneg %p245
        %p356 = pneg %p242
        %s357 = sand.u32 %s232, 1
        %s358 = scalar_lea.sflag [#allocation3], %s357
        %s359 = sand.u32 %s232, 1
        %s360 = scalar_lea.vmem [#allocation2], %s359
        %s361 = smul.u32 2, %s28
        %p362 = scmp.lt.s32.totalorder %s27, 1
        %s363 = scalar_select %p362, %s27, 1
        %p364 = scmp.lt.s32.totalorder %s361, 1
        %s365 = scalar_select %p364, %s361, 1
        %s366 = smul.addr %s363, 2
        %s367 = sadd.s32 %s365, %s366
        %s368 = smul.addr %s367, 8
        %s369 = scalar_lea.vmem %s0, %s368
        %s370 = smul.u32 2, %s28
        %s371 = smul.u32 2, %s28
        %p372 = scmp.lt.s32.totalorder %s27, 1
        %s373 = scalar_select %p372, %s27, 1
        %p374 = scmp.lt.s32.totalorder %s371, 1
        %s375 = scalar_select %p374, %s371, 1
        %s376 = smul.addr %s373, 2
        %s377 = sadd.s32 %s375, %s376
        %s378 = smul.addr %s377, 8
        %s379 = scalar_lea.vmem %s1, %s378
        %s380 = smul.u32 2, %s28
        %s381 = smul.u32 2, %s28
        %p382 = scmp.lt.s32.totalorder %s27, 1
        %s383 = scalar_select %p382, %s27, 1
        %p384 = scmp.lt.s32.totalorder %s381, 1
        %s385 = scalar_select %p384, %s381, 1
        %s386 = smul.addr %s383, 2
        %s387 = sadd.s32 %s385, %s386
        %s388 = smul.addr %s387, 8
        %s389 = scalar_lea.vmem %s7, %s388
        %s390 = smul.u32 2, %s28
        %v392 = vld [vmem:[%s369] sm:$0xff]
        %v393 = vld [vmem:[%s369 + $0x8] sm:$0xff]
        %v394 = vld [vmem:[%s379] sm:$0xff]
        %v395 = vld [vmem:[%s379 + $0x8] sm:$0xff]
        %v396 = vld [vmem:[%s2] sm:$0x1]
        %v398 = vlaneseq
        %v399 = vshrl.u32 %v398, 7
        %v400 = vsub.s32 0, %v399
        %v401 = vrot.slane %v396, %v400
        %v403 = vmul.f32 %v392, %v401
        %v404 = vmul.f32 %v393, %v401
        %v405 = vadd.f32 %v394, %v403
        %v406 = vadd.f32 %v395, %v404
        %v407 = vmul.f32 %v405, %v405
        %v408 = vmul.f32 %v406, %v406
        %v409 = vmul.f32 %v405, %v407
        %v410 = vmul.f32 %v406, %v408
        %v411 = vmul.f32 %v409, 0.044715
        %v412 = vmul.f32 %v410, 0.044715
        %v413 = vadd.f32 %v405, %v411
        %v414 = vadd.f32 %v406, %v412
        %v415 = vmul.f32 %v413, 0.7978846
        %v416 = vmul.f32 %v414, 0.7978846
        %v417 = vtanh.pop %v415
        %v418 = vtanh.pop %v416
        %v419 = vadd.f32 %v417, 1.0
        %v420 = vadd.f32 %v418, 1.0
        %v421 = vmul.f32 %v419, 0.5
        %v422 = vmul.f32 %v420, 0.5
        %v423 = vmul.f32 %v405, %v421
        %v424 = vmul.f32 %v406, %v422
        %v425 = vpack.c.bf16 %v424, %v423
        %v426 = vld [vmem:[%s3] sm:$0xff]
        %v427 = vld [vmem:[%s3 + $0x8] sm:$0xff]
        %v428 = vld [vmem:[%s3 + $0x10] sm:$0xff]
        %v429 = vld [vmem:[%s3 + $0x18] sm:$0xff]
        %v430 = vld [vmem:[%s3 + $0x20] sm:$0xff]
        %v431 = vld [vmem:[%s3 + $0x28] sm:$0xff]
        %v432 = vld [vmem:[%s3 + $0x30] sm:$0xff]
        %v433 = vld [vmem:[%s3 + $0x38] sm:$0xff]
        %v434 = vld [vmem:[%s3 + $0x40] sm:$0xff]
        %v435 = vld [vmem:[%s3 + $0x48] sm:$0xff]
        %v436 = vld [vmem:[%s3 + $0x50] sm:$0xff]
        %v437 = vld [vmem:[%s3 + $0x58] sm:$0xff]
        %v438 = vld [vmem:[%s3 + $0x60] sm:$0xff]
        %v439 = vld [vmem:[%s3 + $0x68] sm:$0xff]
        %v440 = vld [vmem:[%s3 + $0x70] sm:$0xff]
        %v441 = vld [vmem:[%s3 + $0x78] sm:$0xff]
        %v442 = vld [vmem:[%s4] sm:$0x3]
        %v444 = vlaneseq
        %v445 = vshrl.u32 %v444, 7
        %v446 = vsub.s32 0, %v445
        %v447 = vrot.slane %v442, %v446
        %v448 = vlaneseq
        %v449 = vshrl.u32 %v448, 7
        %v450 = vsub.s32 1, %v449
        %v451 = vrot.slane %v442, %v450
        %v470 = vunpack.c.l.b16 %v426
        %v471 = vunpack.c.h.b16 %v426
        %v472 = vunpack.c.l.b16 %v427
        %v473 = vunpack.c.h.b16 %v427
        %v474 = vunpack.c.l.b16 %v428
        %v475 = vunpack.c.h.b16 %v428
        %v476 = vunpack.c.l.b16 %v429
        %v477 = vunpack.c.h.b16 %v429
        %v478 = vunpack.c.l.b16 %v430
        %v479 = vunpack.c.h.b16 %v430
        %v480 = vunpack.c.l.b16 %v431
        %v481 = vunpack.c.h.b16 %v431
        %v482 = vunpack.c.l.b16 %v432
        %v483 = vunpack.c.h.b16 %v432
        %v484 = vunpack.c.l.b16 %v433
        %v485 = vunpack.c.h.b16 %v433
        %v486 = vunpack.c.l.b16 %v434
        %v487 = vunpack.c.h.b16 %v434
        %v488 = vunpack.c.l.b16 %v435
        %v489 = vunpack.c.h.b16 %v435
        %v490 = vunpack.c.l.b16 %v436
        %v491 = vunpack.c.h.b16 %v436
        %v492 = vunpack.c.l.b16 %v437
        %v493 = vunpack.c.h.b16 %v437
        %v494 = vunpack.c.l.b16 %v438
        %v495 = vunpack.c.h.b16 %v438
        %v496 = vunpack.c.l.b16 %v439
        %v497 = vunpack.c.h.b16 %v439
        %v498 = vunpack.c.l.b16 %v440
        %v499 = vunpack.c.h.b16 %v440
        %v500 = vunpack.c.l.b16 %v441
        %v501 = vunpack.c.h.b16 %v441
        %v502 = vpack.c.b16 %v472, %v470
        %v503 = vpack.c.b16 %v473, %v471
        %v504 = vpack.c.b16 %v476, %v474
        %v505 = vpack.c.b16 %v477, %v475
        %v506 = vpack.c.b16 %v480, %v478
        %v507 = vpack.c.b16 %v481, %v479
        %v508 = vpack.c.b16 %v484, %v482
        %v509 = vpack.c.b16 %v485, %v483
        %v510 = vpack.c.b16 %v488, %v486
        %v511 = vpack.c.b16 %v489, %v487
        %v512 = vpack.c.b16 %v492, %v490
        %v513 = vpack.c.b16 %v493, %v491
        %v514 = vpack.c.b16 %v496, %v494
        %v515 = vpack.c.b16 %v497, %v495
        %v516 = vpack.c.b16 %v500, %v498
        %v517 = vpack.c.b16 %v501, %v499
        %534 = vmatprep.subr.bf16.mxu0 %v503
        %535 = vmatpush1.bf16.msra.mxu0 %v502
        %536 = vmatprep.subr.bf16.mxu0 %v505
        %537 = vmatpush1.bf16.msra.mxu0 %v504
        %538 = vmatprep.subr.bf16.mxu0 %v507
        %539 = vmatpush1.bf16.msra.mxu0 %v506
        %540 = vmatprep.subr.bf16.mxu0 %v509
        %541 = vmatpush1.bf16.msra.mxu0 %v508
        %542 = vmatprep.subr.bf16.mxu0 %v511
        %543 = vmatpush1.bf16.msra.mxu0 %v510
        %544 = vmatprep.subr.bf16.mxu0 %v513
        %545 = vmatpush1.bf16.msra.mxu0 %v512
        %546 = vmatprep.subr.bf16.mxu0 %v515
        %547 = vmatpush1.bf16.msra.mxu0 %v514
        %548 = vmatprep.subr.bf16.mxu0 %v517
        %549 = vmatpush1.bf16.msra.mxu0 %v516
        %550 = vmatprep.subr.bf16.mxu0 0
        %551 = vmatpush1.bf16.msra.mxu0 0
        %552 = vmatprep.subr.bf16.mxu0 0
        %553 = vmatpush1.bf16.msra.mxu0 0
        %554 = vmatprep.subr.bf16.mxu0 0
        %555 = vmatpush1.bf16.msra.mxu0 0
        %556 = vmatprep.subr.bf16.mxu0 0
        %557 = vmatpush1.bf16.msra.mxu0 0
        %558 = vmatprep.subr.bf16.mxu0 0
        %559 = vmatpush1.bf16.msra.mxu0 0
        %560 = vmatprep.subr.bf16.mxu0 0
        %561 = vmatpush1.bf16.msra.mxu0 0
        %562 = vmatprep.subr.bf16.mxu0 0
        %563 = vmatpush1.bf16.msra.mxu0 0
        %564 = vmatprep.subr.bf16.mxu0 0
        %565 = vmatpush1.bf16.msra.mxu0 0
        %566 = vmatprep.mubr.bf16.mxu0 0
        %567 = vmatmul.mubr.bf16.gmra.mrb[0].mxu0 %v425
        %v568 = vpop.f32.mrb[0].mxu0
        %v569 = vadd.f32 %v447, %v568
        %v570 = vpop.f32.mrb[0].mxu0
        %v571 = vadd.f32 %v451, %v570
        %v572 = vpop.f32.mrb[0].mxu0
        %v573 = vadd.f32 %v447, %v572
        %v574 = vpop.f32.mrb[0].mxu0
        %v575 = vadd.f32 %v451, %v574
        %576 = vdwg.mxu0
        %v577 = vxor.u32 %v571, 2147483648
        %v578 = vxor.u32 %v575, 2147483648
        %v579 = vmul.f32 %v577, 1.442695
        %v580 = vpow.pop %v579
        %v581 = vmul.f32 %v578, 1.442695
        %v582 = vpow.pop %v581
        %v583 = vadd.f32 %v580, 1.0
        %v584 = vadd.f32 %v582, 1.0
        %v585 = vrcp.pop %v583
        %v586 = vmul.f32 1.0, %v585
        %v587 = vrcp.pop %v584
        %v588 = vmul.f32 1.0, %v587
        %v589 = vmul.f32 %v569, %v586
        %v590 = vmul.f32 %v573, %v588
        %v591 = vadd.f32 %v589, %v392
        %v592 = vadd.f32 %v590, %v393
        %593 = vadd.xlane.f32.xlu0 %v591
        %v594 = vpop.xlane.xlu0 %593
        %595 = vadd.xlane.f32.xlu0 %v592
        %v596 = vpop.xlane.xlu0 %595
        %v597 = vrcp.pop 128.0
        %v598 = vmul.f32 %v594, %v597
        %v599 = vmul.f32 %v596, %v597
        %v600 = vsub.f32 %v591, %v598
        %v601 = vsub.f32 %v592, %v599
        %v602 = vmul.f32 %v600, %v600
        %v603 = vmul.f32 %v601, %v601
        %604 = vadd.xlane.f32.xlu0 %v602
        %v605 = vpop.xlane.xlu0 %604
        %606 = vadd.xlane.f32.xlu0 %v603
        %v607 = vpop.xlane.xlu0 %606
        %v608 = vmul.f32 %v605, %v597
        %v609 = vmul.f32 %v607, %v597
        %v610 = vadd.f32 %v608, 1e-05
        %v611 = vadd.f32 %v609, 1e-05
        %v612 = vrsqrt.pop %v610
        %v613 = vrsqrt.pop %v611
        %v614 = vmul.f32 %v600, %v612
        %v615 = vmul.f32 %v601, %v613
        %v616 = vld [vmem:[%s5] sm:$0x1]
        %v618 = vlaneseq
        %v619 = vshrl.u32 %v618, 7
        %v620 = vsub.s32 0, %v619
        %v621 = vrot.slane %v616, %v620
        %v623 = vmul.f32 %v614, %v621
        %v624 = vmul.f32 %v615, %v621
        %v625 = vld [vmem:[%s6] sm:$0x1]
        %v627 = vlaneseq
        %v628 = vshrl.u32 %v627, 7
        %v629 = vsub.s32 0, %v628
        %v630 = vrot.slane %v625, %v629
        %v632 = vadd.f32 %v623, %v630
        %v633 = vadd.f32 %v624, %v630
        %634 = vst [vmem:[%s389] sm:$0xff] %v632
        %635 = vst [vmem:[%s389 + $0x8] sm:$0xff] %v633
        %v636 = vadd.f32 %v632, %v633
        %v637 = vrot.slane %v636, 4
        %v638 = vadd.f32 %v636, %v637
        %v639 = vrot.slane %v638, 2
        %v640 = vadd.f32 %v638, %v639
        %v641 = vrot.slane %v640, 1
        %v642 = vadd.f32 %v640, %v641
        %p643 = scmp.eq.s32.totalorder %s28, 0
        // Predicated region
        $region49: #{s4_model_forward.5} parent=47 // pred_check
          %p644 = pneg %p643
        $region50: #{s4_model_forward.5} parent=47 // pred_check_branch
          %646 = sbr.rel (%p644) target = $region52
        $region51: #{s4_model_forward.5} parent=47 // pred_region
          %647 = vst [vmem:[%s360] sm:$0x1] %v642
        $region52: #{s4_model_forward.5} parent=47 // pred_fallthru
          _
        %p648 = scmp.ne.s32.totalorder %s28, 0
        // Predicated region
        $region53: #{s4_model_forward.5} parent=47 // pred_check
          %p649 = pneg %p648
        $region54: #{s4_model_forward.5} parent=47 // pred_check_branch
          %651 = sbr.rel (%p649) target = $region56
        $region55: #{s4_model_forward.5} parent=47 // pred_region
          %v652 = vld [vmem:[%s360] sm:$0x1]
          %v653 = vadd.f32 %v652, %v642
          %654 = vst [vmem:[%s360] sm:$0x1] %v653
        $region56: #{s4_model_forward.5} parent=47 // pred_fallthru
          _
        %s655 = smul.u32 2, %s28
        %p656 = scmp.lt.s32.totalorder %s27, 1
        %s657 = scalar_select %p656, %s27, 1
        %p658 = scmp.lt.s32.totalorder %s655, 1
        %s659 = scalar_select %p658, %s655, 1
        %s660 = smul.addr %s657, 2
        %s661 = sadd.s32 %s659, %s660
        %s662 = smul.addr %s661, 8
        %s663 = scalar_lea.vmem %s7, %s662
        %s664 = sand.u32 %s232, 1
        %s665 = scalar_lea.sflag [#allocation3], %s664
        %s666 = sand.u32 %s232, 1
        %s667 = scalar_lea.vmem [#allocation2], %s666
        // Predicated region
        $region57: #{s4_model_forward.5} parent=47 // pred_check
          %p668 = pneg %p216
        $region58: #{s4_model_forward.5} parent=47 // pred_check_branch
          %670 = sbr.rel (%p668) target = $region60
        $region59: #{s4_model_forward.5} parent=47 // pred_region
          %s671 = smul.u32 2, %s28
        $region60: #{s4_model_forward.5} parent=47 // pred_fallthru
          _
        // Predicated region
        $region61: #{s4_model_forward.5} parent=47 // pred_check
          %p672 = pneg %p242
        $region62: #{s4_model_forward.5} parent=47 // pred_check_branch
          %674 = sbr.rel (%p672) target = $region64
        $region63: #{s4_model_forward.5} parent=47 // pred_region
          %s676 = ssub.s32 16, 16
          %677 = vsyncadd %s665, %s676
          %s678 = smul.addr %s27, 16
          %s679 = scalar_lea.hbm %s8, %s678
          %s681 = sshll.u32 %s667, 4
          %s682 = int_to_ptr.vmem [resolvable:$true] %s681
          %684 = dma.vmem_to_hbm [thread:$0]  %s682, 16, %s679, %s665
        $region64: #{s4_model_forward.5} parent=47 // pred_fallthru
          _
      $region48: #{s4_model_forward.5} parent=5 // pred_fallthru
        _
      %p685 = scmp.le.s32.totalorder 2, %s18
      // Predicated region
      $region65: #{s4_model_forward.5} parent=5 // pred_check
        %p686 = pneg %p685
      $region66: #{s4_model_forward.5} parent=5 // pred_check_branch
        %688 = sbr.rel (%p686) target = $region68
      $region67: #{s4_model_forward.5} parent=5 // pred_region
        %s689 = ssub.s32 %s18, 2
        // Predicated region
        $region69: #{s4_model_forward.5} parent=67 // pred_check
          %p690 = pneg %p222
        $region70: #{s4_model_forward.5} parent=67 // pred_check_branch
          %692 = sbr.rel (%p690) target = $region72
        $region71: #{s4_model_forward.5} parent=67 // pred_region
          %s693 = smul.u32 2, %s30
          %p694 = scmp.lt.s32.totalorder %s29, 1
          %s695 = scalar_select %p694, %s29, 1
          %p696 = scmp.lt.s32.totalorder %s693, 1
          %s697 = scalar_select %p696, %s693, 1
          %s698 = smul.addr %s695, 2
          %s699 = sadd.s32 %s697, %s698
          %s700 = smul.addr %s699, 8
          %s701 = scalar_lea.vmem %s7, %s700
        $region72: #{s4_model_forward.5} parent=67 // pred_fallthru
          _
        // Predicated region
        $region73: #{s4_model_forward.5} parent=67 // pred_check
          %p702 = pneg %p248
        $region74: #{s4_model_forward.5} parent=67 // pred_check_branch
          %704 = sbr.rel (%p702) target = $region76
        $region75: #{s4_model_forward.5} parent=67 // pred_region
          %s705 = sand.u32 %s233, 1
          %s706 = scalar_lea.sflag [#allocation3], %s705
          %s707 = sand.u32 %s233, 1
          %s708 = scalar_lea.vmem [#allocation2], %s707
          %709 = dma.done %s706, 16
        $region76: #{s4_model_forward.5} parent=67 // pred_fallthru
          _
      $region68: #{s4_model_forward.5} parent=5 // pred_fallthru
        _
    $region6: #{s4_model_forward.5} parent=1 // loop_footer
      %s22 = sadd.s32 1, %s18
    $region7: #{s4_model_forward.5} parent=1 // loop_footer_branch
      %17 = sbr.rel target = $region3
    $region8: #{s4_model_forward.5} parent=1 // loop_exit
      _
    %710 = vsyncpa [#allocation3], 1
    %s711 = scalar_lea.sflag [#allocation3], 1
    %712 = vsyncpa %s711, 1

</llo_original>
